<compile_context>
chip_gen: v6e
topology: v6e:2x2x1
jax: 0.10.0
libtpu: 0.0.40
codegen_flags: <defaults>
</compile_context>

<pallas_src>
import functools

import jax
import jax.numpy as jnp
from jax.experimental import pallas as pl
from jax.experimental.pallas import tpu as pltpu


# ----------------------------------------------------------------------------
# Kernel 1: dense retrieval scores  (query_vectors @ kb_embeddings^T)
# ----------------------------------------------------------------------------
def _retrieval_kernel(q_ref, kb_ref, o_ref):
    o_ref[...] = jnp.dot(q_ref[...], kb_ref[...],
                         preferred_element_type=jnp.float32)


def retrieval_scores(query_vectors, kb_embeddings_t, *, tile_n=512):
    """query_vectors [B, D], kb_embeddings_t [D, N] -> scores [B, N] f32."""
    B, D = query_vectors.shape
    _, N = kb_embeddings_t.shape

    # Pad B up to >= 8 sublanes so the LHS vregs are not mostly masked.
    b_pad = max(8, ((B + 7) // 8) * 8)
    # Lane tile over the KB (N) axis: >= 512 lanes when the KB is big enough,
    # otherwise a single 128-aligned tile.  The tile is sized conservatively so
    # 2 buffers x (D x tile_n) bf16 stays far below even v7x's scoped VMEM.
    # (Add a K grid axis too if D ever gets large.)
    tn = tile_n if N >= tile_n else ((N + 127) // 128) * 128
    n_pad = ((N + tn - 1) // tn) * tn

    # bf16 KB stream halves HBM traffic (this kernel is memory bound);
    # accumulation stays f32 so top-k ordering is preserved.
    q = jnp.zeros((b_pad, D), jnp.bfloat16).at[:B, :].set(
        query_vectors.astype(jnp.bfloat16))
    kb = kb_embeddings_t.astype(jnp.bfloat16)
    if n_pad != N:
        kb = jnp.pad(kb, ((0, 0), (0, n_pad - N)))

    out = pl.pallas_call(
        _retrieval_kernel,
        out_shape=jax.ShapeDtypeStruct((b_pad, n_pad), jnp.float32),
        grid=(n_pad // tn,),
        in_specs=[pl.BlockSpec((b_pad, D), lambda j: (0, 0)),
                  pl.BlockSpec((D, tn), lambda j: (0, j))],
        out_specs=pl.BlockSpec((b_pad, tn), lambda j: (0, j)),
        compiler_params=pltpu.CompilerParams(
            dimension_semantics=("parallel",)),   # both TensorCores on v7x
        cost_estimate=pl.CostEstimate(
            flops=2 * b_pad * D * n_pad,
            transcendentals=0,
            bytes_accessed=b_pad * D * 2 + D * n_pad * 2 + b_pad * n_pad * 4),
    )(q, kb)
    return out[:B, :N]


# ----------------------------------------------------------------------------
# Kernel 2: rerank FFNN classifier on [CLS] hidden states
#           rr_scores = relu(h @ W1 + b1) . w2_row + b2
# ----------------------------------------------------------------------------
def _ffnn_kernel(x_ref, w1_ref, b1_ref, w2_ref, b2_ref, o_ref):
    h = jnp.dot(x_ref[...], w1_ref[...],
                preferred_element_type=jnp.float32) + b1_ref[...]
    h = jnp.maximum(h, 0.0)
    # Output width is 1: a 1-wide MXU matmul wastes the whole systolic column
    # dimension, so run the second layer as a VPU multiply + lane reduction.
    o_ref[...] = jnp.sum(h * w2_ref[...], axis=-1, keepdims=True) + b2_ref[...]


def rerank_ffnn(hidden, w1, b1, w2_row, b2):
    """hidden [R, H], w1 [H, F], b1 [1, F], w2_row [1, F], b2 [1, 1] -> [R, 1]."""
    R, H = hidden.shape
    F = w1.shape[1]
    return pl.pallas_call(
        _ffnn_kernel,
        out_shape=jax.ShapeDtypeStruct((R, 1), jnp.float32),
        grid=(1,),
        in_specs=[pl.BlockSpec((R, H), lambda i: (0, 0)),
                  pl.BlockSpec((H, F), lambda i: (0, 0)),
                  pl.BlockSpec((1, F), lambda i: (0, 0)),
                  pl.BlockSpec((1, F), lambda i: (0, 0)),
                  pl.BlockSpec((1, 1), lambda i: (0, 0))],
        out_specs=pl.BlockSpec((R, 1), lambda i: (0, 0)),
    )(hidden, w1, b1, w2_row, b2)


# ----------------------------------------------------------------------------
# Kernel 3 (fused): pre-attention aggregation + output distributions
#   A_D[b, k]   = mean over (layers, heads, Y, X) of pre-attention weights
#   P_attention = softmax(A_D)
#   Q_coarse    = log_softmax(retrieval scores of the k2 snippets)
#   Q_fine      = log_softmax(top-k2 rerank scores)
# The layer axis is the grid (reduction) axis with an f32 accumulator scratch;
# the (heads, Y, X) axes arrive pre-merged by a FREE trailing reshape (no
# transpose / HBM copy of the attention tensor).
# ----------------------------------------------------------------------------
def _dist_kernel(pre_ref, retr_ref, rr_ref, p_ref, qc_ref, qf_ref, acc_ref,
                 *, inv_denom):
    l = pl.program_id(0)

    @pl.when(l == 0)
    def _init():
        acc_ref[...] = jnp.zeros_like(acc_ref)

    # pre_ref block is (B, k2, M) for the current layer (M = heads*Y*X).
    acc_ref[...] += jnp.sum(pre_ref[...], axis=-1)

    @pl.when(l == pl.num_programs(0) - 1)
    def _finalize():
        a_d = acc_ref[...] * inv_denom
        a = a_d - jnp.max(a_d, axis=-1, keepdims=True)
        e = jnp.exp(a)
        p_ref[...] = e / jnp.sum(e, axis=-1, keepdims=True)

        def _log_softmax(x):
            x = x - jnp.max(x, axis=-1, keepdims=True)
            return x - jnp.log(jnp.sum(jnp.exp(x), axis=-1, keepdims=True))

        qc_ref[...] = _log_softmax(retr_ref[...])
        qf_ref[...] = _log_softmax(rr_ref[...])


def attention_and_distributions(pre_attn, k2_retr_scores, k2_rr_scores):
    """pre_attn [B, L, k2, M], scores [B, k2] -> (P_attention, Q_coarse, Q_fine)."""
    B, L, K2, M = pre_attn.shape
    spec_bk = pl.BlockSpec((B, K2), lambda l: (0, 0))
    kernel = functools.partial(_dist_kernel, inv_denom=1.0 / float(L * M))
    return pl.pallas_call(
        kernel,
        out_shape=(jax.ShapeDtypeStruct((B, K2), jnp.float32),) * 3,
        grid=(L,),
        in_specs=[pl.BlockSpec((B, None, K2, M), lambda l: (0, l, 0, 0)),
                  spec_bk, spec_bk],
        out_specs=(spec_bk, spec_bk, spec_bk),
        scratch_shapes=[pltpu.VMEM((B, K2), jnp.float32)],
        compiler_params=pltpu.CompilerParams(
            dimension_semantics=("arbitrary",)),   # layer axis is a reduction
    )(pre_attn.astype(jnp.float32), k2_retr_scores, k2_rr_scores)


# ----------------------------------------------------------------------------
# Wrapper reproducing the DialogModel.forward numeric flow
# ----------------------------------------------------------------------------
@functools.partial(jax.jit, static_argnames=("k1", "k2"))
def dialog_model_forward(query_vectors, kb_embeddings_t, cls_hidden_states,
                         pre_attentions, w1, b1, w2, b2, *, k1, k2):
    """
    query_vectors      : [B, D]                   retrieval embeddings of the dialogs
    kb_embeddings_t    : [D, N]                   KB passage embeddings (transposed)
    cls_hidden_states  : [B, k1, H]               [CLS] state per candidate
                                                  (stands in for rerank_model output)
    pre_attentions     : [B, L, k2, heads, Y, X]  gen-model pre-attention weights
                                                  (stands in for gen_model output)
    returns dict with Q_coarse, Q_fine, P_attention, each [B, k2].
    """
    B, _ = query_vectors.shape
    H = cls_hidden_states.shape[-1]
    _, L, K2, heads, Y, X = pre_attentions.shape

    # --- coarse retrieval: inner-product search (FAISS index.search equivalent)
    scores_all = retrieval_scores(query_vectors, kb_embeddings_t)      # [B, N]
    retr_scores, retr_indices = jax.lax.top_k(scores_all, k1)          # [B, k1]
    # TODO(synk): for very large KBs, fuse a streaming top-k1 into the tiled
    # retrieval kernel to avoid materializing the full [B, N] scores in HBM.

    # --- rerank FFNN on [CLS] states of the k1 candidates
    rr_scores = rerank_ffnn(cls_hidden_states.reshape(B * k1, H),
                            w1, b1, w2, b2)                            # [B*k1, 1]
    rr_scores = rr_scores.reshape(B, k1)                               # view(-1) per dialog

    # --- sort descending, keep top-k2 (torch.sort descending + slice)
    sorted_rr_scores, sorted_idx = jax.lax.top_k(rr_scores, k1)        # full sort
    k2_indices = sorted_idx[:, :k2]                                    # [B, k2]
    k2_rr_scores = sorted_rr_scores[:, :k2]                            # [B, k2]
    k2_retr_scores = jnp.take_along_axis(retr_scores, k2_indices, axis=1)

    # --- pre-attention aggregation + distributions in one fused kernel.
    # Only the trailing (heads, Y, X) axes are merged: this reshape is a free
    # metadata change, not a transpose copy.
    pre_flat = pre_attentions.reshape(B, L, K2, heads * Y * X)
    p_att, q_coarse, q_fine = attention_and_distributions(
        pre_flat, k2_retr_scores, k2_rr_scores)

    # TODO(synk): the final gen_model(input_ids=..., labels=...) seq2seq forward
    # (generation_out) and all tokenizer / KB-dataframe string handling have no
    # Pallas equivalent; only the distributions_output branch is reproduced.
    return {"Q_coarse": q_coarse, "Q_fine": q_fine, "P_attention": p_att}


if __name__ == "__main__":
    # Small, deterministic synthetic problem (but big enough that the
    # retrieval matmul actually tiles / pipelines over the KB axis).
    B = 2            # number of dialog contexts
    D = 128          # retrieval embedding dim
    N = 1024         # knowledge-base size  (2 x 512-lane KB tiles)
    k1 = 8           # coarse retrieval depth
    k2 = 4           # rerank depth
    H = 32           # rerank [CLS] hidden size
    FF = 16          # rerank FFNN hidden size
    L, heads, Y, X = 2, 4, 8, 8   # gen-model attention map geometry

    key = jax.random.PRNGKey(0)
    ks = jax.random.split(key, 8)

    query_vectors = jax.random.normal(ks[0], (B, D), jnp.float32)
    kb_embeddings_t = jax.random.normal(ks[1], (D, N), jnp.float32)
    # Stand-in for rerank_model(...).last_hidden_state[:, 0, :] (no Pallas BERT here).
    cls_hidden_states = jax.random.normal(ks[2], (B, k1, H), jnp.float32)
    # Stand-in for gen_model(..., output_pre_attention_weights=True).pre_attentions.
    pre_attentions = jax.nn.softmax(
        jax.random.normal(ks[3], (B, L, k2, heads, Y, X), jnp.float32), axis=-1)

    # FFNN (rr_classifier) parameters, deterministic init.  w2 is the Linear(F,1)
    # weight stored as a (1, F) row for the in-kernel VPU reduction.
    w1 = jax.random.normal(ks[4], (H, FF), jnp.float32) * 0.1
    b1 = jnp.zeros((1, FF), jnp.float32)
    w2 = jax.random.normal(ks[5], (1, FF), jnp.float32) * 0.1
    b2 = jnp.zeros((1, 1), jnp.float32)

    out = dialog_model_forward(query_vectors, kb_embeddings_t, cls_hidden_states,
                               pre_attentions, w1, b1, w2, b2, k1=k1, k2=k2)
    jax.block_until_ready(out)

    # Pure-JAX reference.  The retrieval matmul reference uses the same
    # bf16-input / f32-accumulate formulation as the kernel.
    q_bf = query_vectors.astype(jnp.bfloat16)
    kb_bf = kb_embeddings_t.astype(jnp.bfloat16)
    scores_ref = jnp.dot(q_bf, kb_bf, preferred_element_type=jnp.float32)
    retr_ref, _ = jax.lax.top_k(scores_ref, k1)
    h_ref = jnp.maximum(cls_hidden_states.reshape(B * k1, H) @ w1 + b1, 0.0)
    rr_ref = (jnp.sum(h_ref * w2, axis=-1, keepdims=True) + b2).reshape(B, k1)
    srr_ref, sidx_ref = jax.lax.top_k(rr_ref, k1)
    qf_ref = jax.nn.log_softmax(srr_ref[:, :k2], axis=-1)
    qc_ref = jax.nn.log_softmax(
        jnp.take_along_axis(retr_ref, sidx_ref[:, :k2], axis=1), axis=-1)
    ad_ref = jnp.mean(pre_attentions, axis=(1, 3, 4, 5))
    pa_ref = jax.nn.softmax(ad_ref, axis=-1)

    assert out["Q_fine"].shape == (B, k2)
    assert out["Q_coarse"].shape == (B, k2)
    assert out["P_attention"].shape == (B, k2)
    assert jnp.allclose(out["Q_fine"], qf_ref, atol=1e-4), "Q_fine mismatch"
    assert jnp.allclose(out["Q_coarse"], qc_ref, atol=1e-4), "Q_coarse mismatch"
    assert jnp.allclose(out["P_attention"], pa_ref, atol=1e-4), "P_attention mismatch"

    print("KERNEL_OK")
</pallas_src>

<mosaic_0001>
module attributes {stable_mosaic.version = 11 : i64} {
  func.func @_ffnn_kernel(%arg0: i32, %arg1: memref<16x32xf32, #tpu.memory_space<vmem>>, %arg2: memref<32x16xf32, #tpu.memory_space<vmem>>, %arg3: memref<1x16xf32, #tpu.memory_space<vmem>>, %arg4: memref<1x16xf32, #tpu.memory_space<vmem>>, %arg5: memref<1x1xf32, #tpu.memory_space<vmem>>, %arg6: memref<16x1xf32, #tpu.memory_space<vmem>>) attributes {dimension_semantics = [#tpu.dimension_semantics<arbitrary>], iteration_bounds = array<i64: 1>, scalar_prefetch = 0 : i64, scratch_operands = 0 : i64, tpu.core_type = #tpu.core_type<tc>, window_params = [{pipeline_mode = #tpu.pipeline_mode<synchronous>, transform_indices = @transform_0, window_bounds = array<i64: 16, 32>}, {pipeline_mode = #tpu.pipeline_mode<synchronous>, transform_indices = @transform_1, window_bounds = array<i64: 32, 16>}, {pipeline_mode = #tpu.pipeline_mode<synchronous>, transform_indices = @transform_2, window_bounds = array<i64: 1, 16>}, {pipeline_mode = #tpu.pipeline_mode<synchronous>, transform_indices = @transform_3, window_bounds = array<i64: 1, 16>}, {pipeline_mode = #tpu.pipeline_mode<synchronous>, transform_indices = @transform_4, window_bounds = array<i64: 1, 1>}, {pipeline_mode = #tpu.pipeline_mode<synchronous>, transform_indices = @transform_5, window_bounds = array<i64: 16, 1>}]} {
    %c0 = arith.constant 0 : index
    %c0_0 = arith.constant 0 : index
    %0 = vector.load %arg1[%c0, %c0_0] : memref<16x32xf32, #tpu.memory_space<vmem>>, vector<16x32xf32>
    %c0_1 = arith.constant 0 : index
    %c0_2 = arith.constant 0 : index
    %1 = vector.load %arg2[%c0_1, %c0_2] : memref<32x16xf32, #tpu.memory_space<vmem>>, vector<32x16xf32>
    %cst = arith.constant dense<0.000000e+00> : vector<16x16xf32>
    %2 = tpu.matmul %0, %1, %cst {dimension_numbers = #tpu.dot_dimension_numbers<[1], [0], [0], [1], [0, 0, 1, 1], [], []>} : vector<16x32xf32>, vector<32x16xf32>, vector<16x16xf32> -> vector<16x16xf32>
    %c0_3 = arith.constant 0 : index
    %c0_4 = arith.constant 0 : index
    %3 = vector.load %arg3[%c0_3, %c0_4] : memref<1x16xf32, #tpu.memory_space<vmem>>, vector<1x16xf32>
    %4 = vector.broadcast %3 : vector<1x16xf32> to vector<16x16xf32>
    %5 = arith.addf %2, %4 : vector<16x16xf32>
    %cst_5 = arith.constant 0.000000e+00 : f32
    %6 = vector.broadcast %cst_5 : f32 to vector<16x16xf32>
    %7 = arith.maximumf %5, %6 : vector<16x16xf32>
    %c0_6 = arith.constant 0 : index
    %c0_7 = arith.constant 0 : index
    %8 = vector.load %arg4[%c0_6, %c0_7] : memref<1x16xf32, #tpu.memory_space<vmem>>, vector<1x16xf32>
    %9 = vector.broadcast %8 : vector<1x16xf32> to vector<16x16xf32>
    %10 = arith.mulf %7, %9 : vector<16x16xf32>
    %cst_8 = arith.constant dense<0.000000e+00> : vector<16xf32>
    %11 = vector.multi_reduction <add>, %10, %cst_8 [1] : vector<16x16xf32> to vector<16xf32>
    %12 = vector.shape_cast %11 : vector<16xf32> to vector<16x1xf32>
    %c0_9 = arith.constant 0 : index
    %c0_10 = arith.constant 0 : index
    %13 = vector.load %arg5[%c0_9, %c0_10] : memref<1x1xf32, #tpu.memory_space<vmem>>, vector<1x1xf32>
    %14 = vector.broadcast %13 : vector<1x1xf32> to vector<16x1xf32>
    %15 = arith.addf %12, %14 : vector<16x1xf32>
    %c0_11 = arith.constant 0 : index
    %c0_12 = arith.constant 0 : index
    %16 = vector.load %arg6[%c0_11, %c0_12] : memref<16x1xf32, #tpu.memory_space<vmem>>, vector<16x1xf32>
    tpu.vector_store %arg6[%c0_11, %c0_12], %15 {strides = array<i32>} : memref<16x1xf32, #tpu.memory_space<vmem>>, vector<16x1xf32>,
    return
  }
  func.func @transform_0(%arg0: i32) -> (i32, i32) {
    %c0_i32 = arith.constant 0 : i32
    %c0_i32_0 = arith.constant 0 : i32
    %c0_i32_1 = arith.constant 0 : i32
    return %c0_i32, %c0_i32_0 : i32, i32
  }
  func.func @transform_1(%arg0: i32) -> (i32, i32) {
    %c0_i32 = arith.constant 0 : i32
    %c0_i32_0 = arith.constant 0 : i32
    %c0_i32_1 = arith.constant 0 : i32
    return %c0_i32, %c0_i32_0 : i32, i32
  }
  func.func @transform_2(%arg0: i32) -> (i32, i32) {
    %c0_i32 = arith.constant 0 : i32
    %c0_i32_0 = arith.constant 0 : i32
    %c0_i32_1 = arith.constant 0 : i32
    return %c0_i32, %c0_i32_0 : i32, i32
  }
  func.func @transform_3(%arg0: i32) -> (i32, i32) {
    %c0_i32 = arith.constant 0 : i32
    %c0_i32_0 = arith.constant 0 : i32
    %c0_i32_1 = arith.constant 0 : i32
    return %c0_i32, %c0_i32_0 : i32, i32
  }
  func.func @transform_4(%arg0: i32) -> (i32, i32) {
    %c0_i32 = arith.constant 0 : i32
    %c0_i32_0 = arith.constant 0 : i32
    %c0_i32_1 = arith.constant 0 : i32
    return %c0_i32, %c0_i32_0 : i32, i32
  }
  func.func @transform_5(%arg0: i32) -> (i32, i32) {
    %c0_i32 = arith.constant 0 : i32
    %c0_i32_0 = arith.constant 0 : i32
    %c0_i32_1 = arith.constant 0 : i32
    return %c0_i32, %c0_i32_0 : i32, i32
  }
}

module attributes {stable_mosaic.version = 11 : i64} {
  func.func @_retrieval_kernel(%arg0: i32, %arg1: memref<8x128xbf16, #tpu.memory_space<vmem>>, %arg2: memref<128x512xbf16, #tpu.memory_space<vmem>>, %arg3: memref<8x512xf32, #tpu.memory_space<vmem>>) attributes {dimension_semantics = [#tpu.dimension_semantics<parallel>], iteration_bounds = array<i64: 2>, scalar_prefetch = 0 : i64, scratch_operands = 0 : i64, tpu.core_type = #tpu.core_type<tc>, window_params = [{pipeline_mode = #tpu.pipeline_mode<synchronous>, transform_indices = @transform_0, window_bounds = array<i64: 8, 128>}, {transform_indices = @transform_1, window_bounds = array<i64: 128, 512>}, {transform_indices = @transform_2, window_bounds = array<i64: 8, 512>}]} {
    %c0 = arith.constant 0 : index
    %c0_0 = arith.constant 0 : index
    %0 = vector.load %arg1[%c0, %c0_0] : memref<8x128xbf16, #tpu.memory_space<vmem>>, vector<8x128xbf16>
    %c0_1 = arith.constant 0 : index
    %c0_2 = arith.constant 0 : index
    %1 = vector.load %arg2[%c0_1, %c0_2] : memref<128x512xbf16, #tpu.memory_space<vmem>>, vector<128x512xbf16>
    %cst = arith.constant dense<0.000000e+00> : vector<8x512xf32>
    %2 = tpu.matmul %0, %1, %cst {dimension_numbers = #tpu.dot_dimension_numbers<[1], [0], [0], [1], [0, 0, 1, 1], [], []>} : vector<8x128xbf16>, vector<128x512xbf16>, vector<8x512xf32> -> vector<8x512xf32>
    %c0_3 = arith.constant 0 : index
    %c0_4 = arith.constant 0 : index
    %3 = vector.load %arg3[%c0_3, %c0_4] : memref<8x512xf32, #tpu.memory_space<vmem>>, vector<8x512xf32>
    tpu.vector_store %arg3[%c0_3, %c0_4], %2 {strides = array<i32>} : memref<8x512xf32, #tpu.memory_space<vmem>>, vector<8x512xf32>,
    return
  }
  func.func @transform_0(%arg0: i32) -> (i32, i32) {
    %c0_i32 = arith.constant 0 : i32
    %c0_i32_0 = arith.constant 0 : i32
    %c0_i32_1 = arith.constant 0 : i32
    return %c0_i32, %c0_i32_0 : i32, i32
  }
  func.func @transform_1(%arg0: i32) -> (i32, i32) {
    %c0_i32 = arith.constant 0 : i32
    %c0_i32_0 = arith.constant 0 : i32
    return %c0_i32, %arg0 : i32, i32
  }
  func.func @transform_2(%arg0: i32) -> (i32, i32) {
    %c0_i32 = arith.constant 0 : i32
    %c0_i32_0 = arith.constant 0 : i32
    return %c0_i32, %arg0 : i32, i32
  }
}

module attributes {stable_mosaic.version = 11 : i64} {
  func.func @_dist_kernel(%arg0: i32, %arg1: memref<2x1x4x256xf32, #tpu.memory_space<vmem>>, %arg2: memref<2x4xf32, #tpu.memory_space<vmem>>, %arg3: memref<2x4xf32, #tpu.memory_space<vmem>>, %arg4: memref<2x4xf32, #tpu.memory_space<vmem>>, %arg5: memref<2x4xf32, #tpu.memory_space<vmem>>, %arg6: memref<2x4xf32, #tpu.memory_space<vmem>>, %arg7: memref<2x4xf32, #tpu.memory_space<vmem>>) attributes {dimension_semantics = [#tpu.dimension_semantics<arbitrary>], iteration_bounds = array<i64: 2>, scalar_prefetch = 0 : i64, scratch_operands = 1 : i64, tpu.core_type = #tpu.core_type<tc>, window_params = [{transform_indices = @transform_0, window_bounds = array<i64: 2, 1, 4, 256>}, {pipeline_mode = #tpu.pipeline_mode<synchronous>, transform_indices = @transform_1, window_bounds = array<i64: 2, 4>}, {pipeline_mode = #tpu.pipeline_mode<synchronous>, transform_indices = @transform_2, window_bounds = array<i64: 2, 4>}, {pipeline_mode = #tpu.pipeline_mode<synchronous>, transform_indices = @transform_3, window_bounds = array<i64: 2, 4>}, {pipeline_mode = #tpu.pipeline_mode<synchronous>, transform_indices = @transform_4, window_bounds = array<i64: 2, 4>}, {pipeline_mode = #tpu.pipeline_mode<synchronous>, transform_indices = @transform_5, window_bounds = array<i64: 2, 4>}]} {
    %c0_i32 = arith.constant 0 : i32
    %0 = arith.cmpi eq, %arg0, %c0_i32 : i32
    %1 = arith.extui %0 : i1 to i32
    %c0_i32_0 = arith.constant 0 : i32
    %2 = arith.cmpi ne, %1, %c0_i32_0 : i32
    scf.if %2 {
      %cst_9 = arith.constant 0.000000e+00 : f32
      %12 = vector.broadcast %cst_9 : f32 to vector<2x4xf32>
      %c0_10 = arith.constant 0 : index
      %c0_11 = arith.constant 0 : index
      %13 = vector.load %arg7[%c0_10, %c0_11] : memref<2x4xf32, #tpu.memory_space<vmem>>, vector<2x4xf32>
      tpu.vector_store %arg7[%c0_10, %c0_11], %12 {strides = array<i32>} : memref<2x4xf32, #tpu.memory_space<vmem>>, vector<2x4xf32>,
    } else {
    }
    %c0 = arith.constant 0 : index
    %c0_1 = arith.constant 0 : index
    %3 = vector.load %arg7[%c0, %c0_1] : memref<2x4xf32, #tpu.memory_space<vmem>>, vector<2x4xf32>
    %c0_2 = arith.constant 0 : index
    %c0_3 = arith.constant 0 : index
    %c0_4 = arith.constant 0 : index
    %c0_5 = arith.constant 0 : index
    %4 = vector.load %arg1[%c0_2, %c0_3, %c0_4, %c0_5] : memref<2x1x4x256xf32, #tpu.memory_space<vmem>>, vector<2x1x4x256xf32>
    %5 = vector.shape_cast %4 : vector<2x1x4x256xf32> to vector<2x4x256xf32>
    %cst = arith.constant dense<0.000000e+00> : vector<2x4xf32>
    %6 = vector.multi_reduction <add>, %5, %cst [2] : vector<2x4x256xf32> to vector<2x4xf32>
    %7 = arith.addf %3, %6 : vector<2x4xf32>
    %c0_6 = arith.constant 0 : index
    %c0_7 = arith.constant 0 : index
    %8 = vector.load %arg7[%c0_6, %c0_7] : memref<2x4xf32, #tpu.memory_space<vmem>>, vector<2x4xf32>
    tpu.vector_store %arg7[%c0_6, %c0_7], %7 {strides = array<i32>} : memref<2x4xf32, #tpu.memory_space<vmem>>, vector<2x4xf32>,
    %c1_i32 = arith.constant 1 : i32
    %9 = arith.cmpi eq, %arg0, %c1_i32 : i32
    %10 = arith.extui %9 : i1 to i32
    %c0_i32_8 = arith.constant 0 : i32
    %11 = arith.cmpi ne, %10, %c0_i32_8 : i32
    scf.if %11 {
      %c0_9 = arith.constant 0 : index
      %c0_10 = arith.constant 0 : index
      %12 = vector.load %arg7[%c0_9, %c0_10] : memref<2x4xf32, #tpu.memory_space<vmem>>, vector<2x4xf32>
      %cst_11 = arith.constant 0.001953125 : f32
      %13 = vector.broadcast %cst_11 : f32 to vector<2x4xf32>
      %14 = arith.mulf %12, %13 : vector<2x4xf32>
      %cst_12 = arith.constant dense<0xFF800000> : vector<2xf32>
      %15 = vector.multi_reduction <maximumf>, %14, %cst_12 [1] : vector<2x4xf32> to vector<2xf32>
      %16 = vector.shape_cast %15 : vector<2xf32> to vector<2x1xf32>
      %17 = vector.broadcast %16 : vector<2x1xf32> to vector<2x4xf32>
      %18 = arith.subf %14, %17 : vector<2x4xf32>
      %19 = math.exp %18 : vector<2x4xf32>
      %cst_13 = arith.constant dense<0.000000e+00> : vector<2xf32>
      %20 = vector.multi_reduction <add>, %19, %cst_13 [1] : vector<2x4xf32> to vector<2xf32>
      %21 = vector.shape_cast %20 : vector<2xf32> to vector<2x1xf32>
      %22 = vector.broadcast %21 : vector<2x1xf32> to vector<2x4xf32>
      %23 = arith.divf %19, %22 : vector<2x4xf32>
      %c0_14 = arith.constant 0 : index
      %c0_15 = arith.constant 0 : index
      %24 = vector.load %arg4[%c0_14, %c0_15] : memref<2x4xf32, #tpu.memory_space<vmem>>, vector<2x4xf32>
      tpu.vector_store %arg4[%c0_14, %c0_15], %23 {strides = array<i32>} : memref<2x4xf32, #tpu.memory_space<vmem>>, vector<2x4xf32>,
      %c0_16 = arith.constant 0 : index
      %c0_17 = arith.constant 0 : index
      %25 = vector.load %arg2[%c0_16, %c0_17] : memref<2x4xf32, #tpu.memory_space<vmem>>, vector<2x4xf32>
      %cst_18 = arith.constant dense<0xFF800000> : vector<2xf32>
      %26 = vector.multi_reduction <maximumf>, %25, %cst_18 [1] : vector<2x4xf32> to vector<2xf32>
      %27 = vector.shape_cast %26 : vector<2xf32> to vector<2x1xf32>
      %28 = vector.broadcast %27 : vector<2x1xf32> to vector<2x4xf32>
      %29 = arith.subf %25, %28 : vector<2x4xf32>
      %30 = math.exp %29 : vector<2x4xf32>
      %cst_19 = arith.constant dense<0.000000e+00> : vector<2xf32>
      %31 = vector.multi_reduction <add>, %30, %cst_19 [1] : vector<2x4xf32> to vector<2xf32>
      %32 = vector.shape_cast %31 : vector<2xf32> to vector<2x1xf32>
      %33 = math.log %32 : vector<2x1xf32>
      %34 = vector.broadcast %33 : vector<2x1xf32> to vector<2x4xf32>
      %35 = arith.subf %29, %34 : vector<2x4xf32>
      %c0_20 = arith.constant 0 : index
      %c0_21 = arith.constant 0 : index
      %36 = vector.load %arg5[%c0_20, %c0_21] : memref<2x4xf32, #tpu.memory_space<vmem>>, vector<2x4xf32>
      tpu.vector_store %arg5[%c0_20, %c0_21], %35 {strides = array<i32>} : memref<2x4xf32, #tpu.memory_space<vmem>>, vector<2x4xf32>,
      %c0_22 = arith.constant 0 : index
      %c0_23 = arith.constant 0 : index
      %37 = vector.load %arg3[%c0_22, %c0_23] : memref<2x4xf32, #tpu.memory_space<vmem>>, vector<2x4xf32>
      %cst_24 = arith.constant dense<0xFF800000> : vector<2xf32>
      %38 = vector.multi_reduction <maximumf>, %37, %cst_24 [1] : vector<2x4xf32> to vector<2xf32>
      %39 = vector.shape_cast %38 : vector<2xf32> to vector<2x1xf32>
      %40 = vector.broadcast %39 : vector<2x1xf32> to vector<2x4xf32>
      %41 = arith.subf %37, %40 : vector<2x4xf32>
      %42 = math.exp %41 : vector<2x4xf32>
      %cst_25 = arith.constant dense<0.000000e+00> : vector<2xf32>
      %43 = vector.multi_reduction <add>, %42, %cst_25 [1] : vector<2x4xf32> to vector<2xf32>
      %44 = vector.shape_cast %43 : vector<2xf32> to vector<2x1xf32>
      %45 = math.log %44 : vector<2x1xf32>
      %46 = vector.broadcast %45 : vector<2x1xf32> to vector<2x4xf32>
      %47 = arith.subf %41, %46 : vector<2x4xf32>
      %c0_26 = arith.constant 0 : index
      %c0_27 = arith.constant 0 : index
      %48 = vector.load %arg6[%c0_26, %c0_27] : memref<2x4xf32, #tpu.memory_space<vmem>>, vector<2x4xf32>
      tpu.vector_store %arg6[%c0_26, %c0_27], %47 {strides = array<i32>} : memref<2x4xf32, #tpu.memory_space<vmem>>, vector<2x4xf32>,
    } else {
    }
    return
  }
  func.func @transform_0(%arg0: i32) -> (i32, i32, i32, i32) {
    %c0_i32 = arith.constant 0 : i32
    %c0_i32_0 = arith.constant 0 : i32
    %c0_i32_1 = arith.constant 0 : i32
    %c0_i32_2 = arith.constant 0 : i32
    return %c0_i32, %arg0, %c0_i32_0, %c0_i32_1 : i32, i32, i32, i32
  }
  func.func @transform_1(%arg0: i32) -> (i32, i32) {
    %c0_i32 = arith.constant 0 : i32
    %c0_i32_0 = arith.constant 0 : i32
    %c0_i32_1 = arith.constant 0 : i32
    return %c0_i32, %c0_i32_0 : i32, i32
  }
  func.func @transform_2(%arg0: i32) -> (i32, i32) {
    %c0_i32 = arith.constant 0 : i32
    %c0_i32_0 = arith.constant 0 : i32
    %c0_i32_1 = arith.constant 0 : i32
    return %c0_i32, %c0_i32_0 : i32, i32
  }
  func.func @transform_3(%arg0: i32) -> (i32, i32) {
    %c0_i32 = arith.constant 0 : i32
    %c0_i32_0 = arith.constant 0 : i32
    %c0_i32_1 = arith.constant 0 : i32
    return %c0_i32, %c0_i32_0 : i32, i32
  }
  func.func @transform_4(%arg0: i32) -> (i32, i32) {
    %c0_i32 = arith.constant 0 : i32
    %c0_i32_0 = arith.constant 0 : i32
    %c0_i32_1 = arith.constant 0 : i32
    return %c0_i32, %c0_i32_0 : i32, i32
  }
  func.func @transform_5(%arg0: i32) -> (i32, i32) {
    %c0_i32 = arith.constant 0 : i32
    %c0_i32_0 = arith.constant 0 : i32
    %c0_i32_1 = arith.constant 0 : i32
    return %c0_i32, %c0_i32_0 : i32, i32
  }
}

</mosaic_0001>

<llo_original>
// kernel: dialog_model_forward.4
$region0: #{dialog_model_forward.4}
  #allocation0 [shape = 'u32[]', space=smem, size = 0x4, offset = 0x4, fixed_abs, tag = 'smem constant byte address 0x4 - core index']
  #allocation1 [shape = 'u32[144,128]{1,0:T(1,128)}', space=vmem, size = 0x12000, scoped, tag = 'internal scratch']
  #allocation2 [shape = 'f32[1,1]{1,0:T(1,128)S(1)}', space=vmem, size = 0x200, scoped, tag = 'scoped memory for dialog_model_forward.4']
  %s0 = inlined_call_operand.vmem [shape: f32[16,32], index: 0, kind: input, shape index: {}]
  %s1 = inlined_call_operand.vmem [shape: f32[32,16], index: 1, kind: input, shape index: {}]
  %s2 = inlined_call_operand.vmem [shape: f32[1,16], index: 2, kind: input, shape index: {}]
  %s3 = inlined_call_operand.vmem [shape: f32[1,16], index: 3, kind: input, shape index: {}]
  %s4 = inlined_call_operand.<no memory space> [shape: f32[1,1], index: 4, kind: input, shape index: {}]
  %s5 = inlined_call_operand.vmem [shape: f32[16,1], index: 5, kind: output, shape index: {}]
  %s6 = sld [smem:[#allocation0]]
  $region30: #{dialog_model_forward.4} parent=0
    _
  %s8 = ssub.s32 1, %s6
  %s9 = scalar_select 0, %s8, %s6
  %v10 = vstv %s4
  %11 = vst [vmem:[#allocation2] sm:$0x1] %v10
  // Predicated region
  $region2: #{dialog_model_forward.4} parent=0 // pred_check
    _
  $region3: #{dialog_model_forward.4} parent=0 // pred_check_branch
    %13 = sbr.rel (0) target = $region5
  $region4: #{dialog_model_forward.4} parent=0 // pred_region
    _
  $region5: #{dialog_model_forward.4} parent=0 // pred_fallthru
    _
  // Predicated region
  $region6: #{dialog_model_forward.4} parent=0 // pred_check
    _
  $region7: #{dialog_model_forward.4} parent=0 // pred_check_branch
    %15 = sbr.rel (0) target = $region9
  $region8: #{dialog_model_forward.4} parent=0 // pred_region
    _
  $region9: #{dialog_model_forward.4} parent=0 // pred_fallthru
    _
  // Predicated region
  $region10: #{dialog_model_forward.4} parent=0 // pred_check
    _
  $region11: #{dialog_model_forward.4} parent=0 // pred_check_branch
    %17 = sbr.rel (0) target = $region13
  $region12: #{dialog_model_forward.4} parent=0 // pred_region
    _
  $region13: #{dialog_model_forward.4} parent=0 // pred_fallthru
    _
  // Predicated region
  $region14: #{dialog_model_forward.4} parent=0 // pred_check
    _
  $region15: #{dialog_model_forward.4} parent=0 // pred_check_branch
    %19 = sbr.rel (0) target = $region17
  $region16: #{dialog_model_forward.4} parent=0 // pred_region
    _
  $region17: #{dialog_model_forward.4} parent=0 // pred_fallthru
    _
  // Predicated region
  $region18: #{dialog_model_forward.4} parent=0 // pred_check
    _
  $region19: #{dialog_model_forward.4} parent=0 // pred_check_branch
    %21 = sbr.rel (0) target = $region21
  $region20: #{dialog_model_forward.4} parent=0 // pred_region
    _
  $region21: #{dialog_model_forward.4} parent=0 // pred_fallthru
    _
  %v22 = vld [vmem:[%s0] sm:$0xff]
  %v23 = vld [vmem:[%s0 + $0x8] sm:$0xff]
  %v24 = vld [vmem:[%s1] sm:$0xff]
  %v25 = vld [vmem:[%s1 + $0x8] sm:$0xff]
  %v26 = vld [vmem:[%s1 + $0x10] sm:$0xff]
  %v27 = vld [vmem:[%s1 + $0x18] sm:$0xff]
  %v28 = vld [vmem:[%s2] sm:$0x1]
  %v30 = vlaneseq
  %v31 = vshrl.u32 %v30, 7
  %v32 = vsub.s32 0, %v31
  %v33 = vrot.slane %v28, %v32
  %vm35 = vcmask 261120
  %v37 = vsel %vm35, %v22, 0
  %v40 = vsel %vm35, %v23, 0
  %42 = vmatprep.subr.mxu0 0.0
  %43 = vmatpush1.msra.mxu0 0.0
  %44 = vmatprep.subr.mxu0 0.0
  %45 = vmatpush1.msra.mxu0 0.0
  %46 = vmatprep.subr.mxu0 0.0
  %47 = vmatpush1.msra.mxu0 0.0
  %48 = vmatprep.subr.mxu0 0.0
  %49 = vmatpush1.msra.mxu0 0.0
  %50 = vmatprep.subr.mxu0 0.0
  %51 = vmatpush1.msra.mxu0 0.0
  %52 = vmatprep.subr.mxu0 0.0
  %53 = vmatpush1.msra.mxu0 0.0
  %54 = vmatprep.subr.mxu0 0.0
  %55 = vmatpush1.msra.mxu0 0.0
  %56 = vmatprep.subr.mxu0 0.0
  %57 = vmatpush1.msra.mxu0 0.0
  %58 = vmatprep.subr.mxu0 0.0
  %59 = vmatpush1.msra.mxu0 0.0
  %60 = vmatprep.subr.mxu0 0.0
  %61 = vmatpush1.msra.mxu0 0.0
  %62 = vmatprep.subr.mxu0 0.0
  %63 = vmatpush1.msra.mxu0 0.0
  %64 = vmatprep.subr.mxu0 0.0
  %65 = vmatpush1.msra.mxu0 0.0
  %66 = vmatprep.subr.mxu0 0.0
  %67 = vmatpush1.msra.mxu0 %v27
  %68 = vmatprep.subr.mxu0 0.0
  %69 = vmatpush1.msra.mxu0 %v26
  %70 = vmatprep.subr.mxu0 0.0
  %71 = vmatpush1.msra.mxu0 %v25
  %72 = vmatprep.subr.mxu0 0.0
  %73 = vmatpush1.msra.mxu0 %v24
  %74 = vmatprep.subr.mxu0 0.0
  %75 = vmatpush2.msra.mxu0 0.0
  %76 = vmatprep.subr.mxu0 0.0
  %77 = vmatpush2.msra.mxu0 0.0
  %78 = vmatprep.subr.mxu0 0.0
  %79 = vmatpush2.msra.mxu0 0.0
  %80 = vmatprep.subr.mxu0 0.0
  %81 = vmatpush2.msra.mxu0 0.0
  %82 = vmatprep.subr.mxu0 0.0
  %83 = vmatpush2.msra.mxu0 0.0
  %84 = vmatprep.subr.mxu0 0.0
  %85 = vmatpush2.msra.mxu0 0.0
  %86 = vmatprep.subr.mxu0 0.0
  %87 = vmatpush2.msra.mxu0 0.0
  %88 = vmatprep.subr.mxu0 0.0
  %89 = vmatpush2.msra.mxu0 0.0
  %90 = vmatprep.subr.mxu0 0.0
  %91 = vmatpush2.msra.mxu0 0.0
  %92 = vmatprep.subr.mxu0 0.0
  %93 = vmatpush2.msra.mxu0 0.0
  %94 = vmatprep.subr.mxu0 0.0
  %95 = vmatpush2.msra.mxu0 0.0
  %96 = vmatprep.subr.mxu0 0.0
  %97 = vmatpush2.msra.mxu0 0.0
  %98 = vmatprep.subr.mxu0 0.0
  %99 = vmatpush2.msra.mxu0 0.0
  %100 = vmatprep.subr.mxu0 0.0
  %101 = vmatpush2.msra.mxu0 0.0
  %102 = vmatprep.subr.mxu0 0.0
  %103 = vmatpush2.msra.mxu0 0.0
  %104 = vmatprep.subr.mxu0 0.0
  %105 = vmatpush2.msra.mxu0 0.0
  %106 = vmatprep.mubr.f32.mxu0 0.0
  %107 = vmatmul.mubr.f32.gmra.mxu0 %v37
  %v108 = vpop.f32.mrf.mxu0
  %v109 = vadd.f32 %v33, %v108
  %v110 = vpop.f32.mrf.mxu0
  %111 = vmatprep.mubr.f32.mxu0 0.0
  %112 = vmatmul.mubr.f32.gmra.mxu0 %v40
  %v113 = vpop.f32.mrf.mxu0
  %v114 = vadd.f32 %v33, %v113
  %v115 = vpop.f32.mrf.mxu0
  %116 = vdwg.mxu0
  %v117 = vmax.f32 %v109, 0.0
  %v118 = vmax.f32 %v114, 0.0
  %v119 = vld [vmem:[%s3] sm:$0x1]
  %v121 = vlaneseq
  %v122 = vshrl.u32 %v121, 7
  %v123 = vsub.s32 0, %v122
  %v124 = vrot.slane %v119, %v123
  %v126 = vmul.f32 %v117, %v124
  %v127 = vmul.f32 %v118, %v124
  %vm128 = vcmask 130048
  %v129 = vsel %vm128, %v126, 0.0
  %130 = vadd.xlane.f32.xlu0 %v129
  %v131 = vpop.xlane.xlu0 %130
  %v132 = vsel %vm128, %v127, 0.0
  %133 = vadd.xlane.f32.xlu0 %v132
  %v134 = vpop.xlane.xlu0 %133
  %v135 = vld [vmem:[#allocation2] sm:$0x1]
  %v137 = vlaneseq
  %v138 = vshrl.u32 %v137, 7
  %v139 = vsub.s32 0, %v138
  %v140 = vrot.slane %v135, %v139
  %v142 = vadd.f32 %v131, %v140
  %v143 = vadd.f32 %v134, %v140
  %vm144 = vcmask 7168
  %145 = vst.msk [vmem:[%s5] sm:$0xff] %vm144, %v142
  %146 = vst.msk [vmem:[%s5 + $0x8] sm:$0xff] %vm144, %v143
  // Predicated region
  $region22: #{dialog_model_forward.4} parent=0 // pred_check
    _
  $region23: #{dialog_model_forward.4} parent=0 // pred_check_branch
    %148 = sbr.rel (0) target = $region25
  $region24: #{dialog_model_forward.4} parent=0 // pred_region
    _
  $region25: #{dialog_model_forward.4} parent=0 // pred_fallthru
    _
  // Predicated region
  $region26: #{dialog_model_forward.4} parent=0 // pred_check
    _
  $region27: #{dialog_model_forward.4} parent=0 // pred_check_branch
    %150 = sbr.rel (0) target = $region29
  $region28: #{dialog_model_forward.4} parent=0 // pred_region
    _
  $region29: #{dialog_model_forward.4} parent=0 // pred_fallthru
    _

// kernel: dialog_model_forward.3
$region0: #{dialog_model_forward.3}
  #allocation0 [shape = 'u32[]', space=smem, size = 0x4, offset = 0x4, fixed_abs, tag = 'smem constant byte address 0x4 - core index']
  #allocation1 [shape = 'u32[144,128]{1,0:T(1,128)}', space=vmem, size = 0x12000, scoped, tag = 'internal scratch']
  %s0 = inlined_call_operand.vmem [shape: bf16[8,128], index: 0, kind: input, shape index: {}]
  %s1 = inlined_call_operand.vmem [shape: bf16[128,1024], index: 1, kind: input, shape index: {}]
  %s2 = inlined_call_operand.vmem [shape: f32[8,1024], index: 2, kind: output, shape index: {}]
  %s3 = sld [smem:[#allocation0]]
  $region64: #{dialog_model_forward.3} parent=0
    _
  %s5 = ssub.s32 1, %s3
  %s6 = scalar_select 0, %s5, %s3
  $region1: #{dialog_model_forward.3} parent=0
    #allocation2 [shape = 'u8[262144]{0}', space=vmem, size = 0x40000, scoped, tag = 'input window, operand 1']
    loop: start=0, step=1, limit=4
    $region2: #{dialog_model_forward.3} parent=1 // loop_pre_header
      _
    $region3: #{dialog_model_forward.3} parent=1 // loop_header
      %s8 = sphi 0, %s12
      %p9 = scmp.ge.s32.totalorder %s8, 4
      %s16 = sphi 0, %s16
      %s18 = sphi 0, %s16
      %s19 = sphi 0, %s18
      %s33 = sphi 0, %s19
      %s39 = sphi 0, %s41
      %s42 = sphi 0, %s39
      %s43 = sphi 0, %s42
      %s59 = sphi 0, %s43
      %s65 = sphi 0, %s67
      %s68 = sphi 0, %s65
      %s69 = sphi 0, %s68
      %s85 = sphi 0, %s69
    $region4: #{dialog_model_forward.3} parent=1 // loop_header_branch
      %11 = sbr.rel (%p9) target = $region8
    $region5: #{dialog_model_forward.3} parent=1 // loop_body
      %s13 = ssub.s32 %s8, 1
      %s14 = ssub.s32 %s8, 2
      %s15 = sadd.s32 %s8, 1
      %s17 = sadd.s32 %s16, 1
      %p20 = scmp.eq.s32.totalorder %s8, 1
      %p21 = scmp.ne.s32.totalorder %s16, %s18
      %p22 = scmp.eq.s32.totalorder %s8, 0
      %p23 = por %p21, %p22
      %p24 = scmp.ne.s32.totalorder %s16, %s18
      %p25 = scmp.eq.s32.totalorder %s13, 1
      %p26 = por %p24, %p25
      %p27 = scmp.ne.s32.totalorder %s18, %s19
      %p28 = scmp.eq.s32.totalorder %s13, 0
      %p29 = por %p27, %p28
      %p30 = scmp.ne.s32.totalorder %s18, %s19
      %p31 = scmp.eq.s32.totalorder %s14, 1
      %p32 = por %p30, %p31
      %p34 = scmp.ne.s32.totalorder %s19, %s33
      %p35 = scmp.eq.s32.totalorder %s14, 0
      %p36 = por %p34, %p35
      %s37 = ssub.s32 %s8, %s15
      %p38 = scmp.eq.s32.totalorder %s37, 0
      %s40 = sadd.s32 %s39, 1
      %s41 = scalar_select %p38, %s39, %s40
      %p44 = pneg %p38
      %p45 = scmp.eq.s32.totalorder %s8, 1
      %p46 = por %p44, %p45
      %p47 = scmp.ne.s32.totalorder %s39, %s42
      %p48 = scmp.eq.s32.totalorder %s8, 0
      %p49 = por %p47, %p48
      %p50 = scmp.ne.s32.totalorder %s39, %s42
      %p51 = scmp.eq.s32.totalorder %s13, 1
      %p52 = por %p50, %p51
      %p53 = scmp.ne.s32.totalorder %s42, %s43
      %p54 = scmp.eq.s32.totalorder %s13, 0
      %p55 = por %p53, %p54
      %p56 = scmp.ne.s32.totalorder %s42, %s43
      %p57 = scmp.eq.s32.totalorder %s14, 1
      %p58 = por %p56, %p57
      %p60 = scmp.ne.s32.totalorder %s43, %s59
      %p61 = scmp.eq.s32.totalorder %s14, 0
      %p62 = por %p60, %p61
      %s63 = ssub.s32 %s8, %s15
      %p64 = scmp.eq.s32.totalorder %s63, 0
      %s66 = sadd.s32 %s65, 1
      %s67 = scalar_select %p64, %s65, %s66
      %p70 = pneg %p64
      %p71 = scmp.eq.s32.totalorder %s8, 1
      %p72 = por %p70, %p71
      %p73 = scmp.ne.s32.totalorder %s65, %s68
      %p74 = scmp.eq.s32.totalorder %s8, 0
      %p75 = por %p73, %p74
      %p76 = scmp.ne.s32.totalorder %s65, %s68
      %p77 = scmp.eq.s32.totalorder %s13, 1
      %p78 = por %p76, %p77
      %p79 = scmp.ne.s32.totalorder %s68, %s69
      %p80 = scmp.eq.s32.totalorder %s13, 0
      %p81 = por %p79, %p80
      %p82 = scmp.ne.s32.totalorder %s68, %s69
      %p83 = scmp.eq.s32.totalorder %s14, 1
      %p84 = por %p82, %p83
      %p86 = scmp.ne.s32.totalorder %s69, %s85
      %p87 = scmp.eq.s32.totalorder %s14, 0
      %p88 = por %p86, %p87
      %p89 = scmp.le.s32.totalorder 1, %s8
      %p90 = scmp.lt.s32.totalorder %s8, 3
      %p91 = pnand %p89, %p90
      %p92 = pneg %p91
      // Predicated region
      $region9: #{dialog_model_forward.3} parent=5 // pred_check
        _
      $region10: #{dialog_model_forward.3} parent=5 // pred_check_branch
        %94 = sbr.rel (%p91) target = $region12
      $region11: #{dialog_model_forward.3} parent=5 // pred_region
        %s95 = ssub.s32 %s8, 1
        // Predicated region
        $region13: #{dialog_model_forward.3} parent=11 // pred_check
          %p96 = pneg %p29
        $region14: #{dialog_model_forward.3} parent=11 // pred_check_branch
          %98 = sbr.rel (%p96) target = $region16
        $region15: #{dialog_model_forward.3} parent=11 // pred_region
          _
        $region16: #{dialog_model_forward.3} parent=11 // pred_fallthru
          _
      $region12: #{dialog_model_forward.3} parent=5 // pred_fallthru
        _
      %p99 = scmp.lt.s32.totalorder %s8, 2
      // Predicated region
      $region17: #{dialog_model_forward.3} parent=5 // pred_check
        %p100 = pneg %p99
      $region18: #{dialog_model_forward.3} parent=5 // pred_check_branch
        %102 = sbr.rel (%p100) target = $region20
      $region19: #{dialog_model_forward.3} parent=5 // pred_region
        // Predicated region
        $region21: #{dialog_model_forward.3} parent=19 // pred_check
          %p103 = pneg %p49
        $region22: #{dialog_model_forward.3} parent=19 // pred_check_branch
          %105 = sbr.rel (%p103) target = $region24
        $region23: #{dialog_model_forward.3} parent=19 // pred_region
          %s106 = sand.u32 %s39, 1
          %s107 = sand.u32 %s39, 1
          %s108 = smul.addr %s107, 256
          %s109 = scalar_lea.vmem [#allocation2], %s108
          %s110 = smul.u32 4, %s8
          %s111 = smul.addr %s110, 4
          %s112 = scalar_lea.vmem %s1, %s111
          // Predicated region
          $region25: #{dialog_model_forward.3} parent=23 // pred_check
            _
          $region26: #{dialog_model_forward.3} parent=23 // pred_check_branch
            %114 = sbr.rel (0) target = $region28
          $region27: #{dialog_model_forward.3} parent=23 // pred_region
            // Predicated region
            $region29: #{dialog_model_forward.3} parent=27 // pred_check
              _
            $region30: #{dialog_model_forward.3} parent=27 // pred_check_branch
              %116 = sbr.rel (0) target = $region32
            $region31: #{dialog_model_forward.3} parent=27 // pred_region
              loop: start=0, step=1, limit=1
              $region33: #{dialog_model_forward.3} parent=31 // loop_pre_header
                _
              $region34: #{dialog_model_forward.3} parent=31 // loop_header
                %s118 = sphi 0, %s122
                %p119 = scmp.ge.s32.totalorder %s118, 1
                %s123 = sphi %s112, %s112
                %s124 = sphi %s109, %s109
              $region35: #{dialog_model_forward.3} parent=31 // loop_header_branch
                %121 = sbr.rel (%p119) target = $region39
              $region36: #{dialog_model_forward.3} parent=31 // loop_body
                %v125 = vld [vmem:[%s123] sm:$0xff]
                %126 = vst [vmem:[%s124] sm:$0xff] %v125
                %v127 = vld [vmem:[%s123 + $0x8] sm:$0xff]
                %128 = vst [vmem:[%s124 + $0x8] sm:$0xff] %v127
                %v129 = vld [vmem:[%s123 + $0x20] sm:$0xff]
                %130 = vst [vmem:[%s124 + $0x10] sm:$0xff] %v129
                %v131 = vld [vmem:[%s123 + $0x28] sm:$0xff]
                %132 = vst [vmem:[%s124 + $0x18] sm:$0xff] %v131
                %v133 = vld [vmem:[%s123 + $0x40] sm:$0xff]
                %134 = vst [vmem:[%s124 + $0x20] sm:$0xff] %v133
                %v135 = vld [vmem:[%s123 + $0x48] sm:$0xff]
                %136 = vst [vmem:[%s124 + $0x28] sm:$0xff] %v135
                %v137 = vld [vmem:[%s123 + $0x60] sm:$0xff]
                %138 = vst [vmem:[%s124 + $0x30] sm:$0xff] %v137
                %v139 = vld [vmem:[%s123 + $0x68] sm:$0xff]
                %140 = vst [vmem:[%s124 + $0x38] sm:$0xff] %v139
                %v141 = vld [vmem:[%s123 + $0x80] sm:$0xff]
                %142 = vst [vmem:[%s124 + $0x40] sm:$0xff] %v141
                %v143 = vld [vmem:[%s123 + $0x88] sm:$0xff]
                %144 = vst [vmem:[%s124 + $0x48] sm:$0xff] %v143
                %v145 = vld [vmem:[%s123 + $0xa0] sm:$0xff]
                %146 = vst [vmem:[%s124 + $0x50] sm:$0xff] %v145
                %v147 = vld [vmem:[%s123 + $0xa8] sm:$0xff]
                %148 = vst [vmem:[%s124 + $0x58] sm:$0xff] %v147
                %v149 = vld [vmem:[%s123 + $0xc0] sm:$0xff]
                %150 = vst [vmem:[%s124 + $0x60] sm:$0xff] %v149
                %v151 = vld [vmem:[%s123 + $0xc8] sm:$0xff]
                %152 = vst [vmem:[%s124 + $0x68] sm:$0xff] %v151
                %v153 = vld [vmem:[%s123 + $0xe0] sm:$0xff]
                %154 = vst [vmem:[%s124 + $0x70] sm:$0xff] %v153
                %v155 = vld [vmem:[%s123 + $0xe8] sm:$0xff]
                %156 = vst [vmem:[%s124 + $0x78] sm:$0xff] %v155
                %v157 = vld [vmem:[%s123 + $0x100] sm:$0xff]
                %158 = vst [vmem:[%s124 + $0x80] sm:$0xff] %v157
                %v159 = vld [vmem:[%s123 + $0x108] sm:$0xff]
                %160 = vst [vmem:[%s124 + $0x88] sm:$0xff] %v159
                %v161 = vld [vmem:[%s123 + $0x120] sm:$0xff]
                %162 = vst [vmem:[%s124 + $0x90] sm:$0xff] %v161
                %v163 = vld [vmem:[%s123 + $0x128] sm:$0xff]
                %164 = vst [vmem:[%s124 + $0x98] sm:$0xff] %v163
                %v165 = vld [vmem:[%s123 + $0x140] sm:$0xff]
                %166 = vst [vmem:[%s124 + $0xa0] sm:$0xff] %v165
                %v167 = vld [vmem:[%s123 + $0x148] sm:$0xff]
                %168 = vst [vmem:[%s124 + $0xa8] sm:$0xff] %v167
                %v169 = vld [vmem:[%s123 + $0x160] sm:$0xff]
                %170 = vst [vmem:[%s124 + $0xb0] sm:$0xff] %v169
                %v171 = vld [vmem:[%s123 + $0x168] sm:$0xff]
                %172 = vst [vmem:[%s124 + $0xb8] sm:$0xff] %v171
                %v173 = vld [vmem:[%s123 + $0x180] sm:$0xff]
                %174 = vst [vmem:[%s124 + $0xc0] sm:$0xff] %v173
                %v175 = vld [vmem:[%s123 + $0x188] sm:$0xff]
                %176 = vst [vmem:[%s124 + $0xc8] sm:$0xff] %v175
                %v177 = vld [vmem:[%s123 + $0x1a0] sm:$0xff]
                %178 = vst [vmem:[%s124 + $0xd0] sm:$0xff] %v177
                %v179 = vld [vmem:[%s123 + $0x1a8] sm:$0xff]
                %180 = vst [vmem:[%s124 + $0xd8] sm:$0xff] %v179
                %v181 = vld [vmem:[%s123 + $0x1c0] sm:$0xff]
                %182 = vst [vmem:[%s124 + $0xe0] sm:$0xff] %v181
                %v183 = vld [vmem:[%s123 + $0x1c8] sm:$0xff]
                %184 = vst [vmem:[%s124 + $0xe8] sm:$0xff] %v183
                %v185 = vld [vmem:[%s123 + $0x1e0] sm:$0xff]
                %186 = vst [vmem:[%s124 + $0xf0] sm:$0xff] %v185
                %v187 = vld [vmem:[%s123 + $0x1e8] sm:$0xff]
                %188 = vst [vmem:[%s124 + $0xf8] sm:$0xff] %v187
              $region37: #{dialog_model_forward.3} parent=31 // loop_footer
                %s122 = sadd.s32 1, %s118
              $region38: #{dialog_model_forward.3} parent=31 // loop_footer_branch
                %117 = sbr.rel target = $region34
              $region39: #{dialog_model_forward.3} parent=31 // loop_exit
                _
            $region32: #{dialog_model_forward.3} parent=27 // pred_fallthru
              _
            // Predicated region
            $region40: #{dialog_model_forward.3} parent=27 // pred_check
              _
            $region41: #{dialog_model_forward.3} parent=27 // pred_check_branch
              %190 = sbr.rel target = $region43
            $region42: #{dialog_model_forward.3} parent=27 // pred_region
              _
            $region43: #{dialog_model_forward.3} parent=27 // pred_fallthru
              _
          $region28: #{dialog_model_forward.3} parent=23 // pred_fallthru
            _
          %191 = vnop
        $region24: #{dialog_model_forward.3} parent=19 // pred_fallthru
          _
      $region20: #{dialog_model_forward.3} parent=5 // pred_fallthru
        _
      %p192 = scmp.le.s32.totalorder 1, %s8
      %p193 = scmp.lt.s32.totalorder %s8, 3
      %p194 = pnand %p192, %p193
      %p195 = pneg %p194
      // Predicated region
      $region44: #{dialog_model_forward.3} parent=5 // pred_check
        _
      $region45: #{dialog_model_forward.3} parent=5 // pred_check_branch
        %197 = sbr.rel (%p194) target = $region47
      $region46: #{dialog_model_forward.3} parent=5 // pred_region
        %s198 = ssub.s32 %s8, 1
        %s199 = sand.u32 %s42, 1
        %s200 = sand.u32 %s42, 1
        %s201 = smul.addr %s200, 256
        %s202 = scalar_lea.vmem [#allocation2], %s201
        // Predicated region
        $region48: #{dialog_model_forward.3} parent=46 // pred_check
          %p203 = pneg %p55
        $region49: #{dialog_model_forward.3} parent=46 // pred_check_branch
          %205 = sbr.rel (%p203) target = $region51
        $region50: #{dialog_model_forward.3} parent=46 // pred_region
          _
        $region51: #{dialog_model_forward.3} parent=46 // pred_fallthru
          _
        %p206 = pneg %p29
        %p207 = pneg %p26
        %s208 = sand.u32 %s42, 1
        %s209 = sand.u32 %s42, 1
        %s210 = smul.addr %s209, 256
        %s211 = scalar_lea.vmem [#allocation2], %s210
        %p212 = pneg %p55
        %p213 = pneg %p52
        %p214 = pneg %p81
        %p215 = pneg %p78
        %s216 = smul.u32 4, %s13
        %p217 = scmp.lt.s32.totalorder %s216, 7
        %s218 = scalar_select %p217, %s216, 7
        %s219 = smul.addr %s218, 8
        %s220 = scalar_lea.vmem %s2, %s219
        %s221 = smul.u32 4, %s13
        %s222 = smul.u32 4, %s13
        %p223 = scmp.lt.s32.totalorder %s222, 7
        %s224 = scalar_select %p223, %s222, 7
        %s225 = smul.addr %s224, 8
        %s226 = scalar_lea.vmem %s2, %s225
        %s227 = smul.u32 4, %s13
        %v229 = vld [vmem:[%s0] sm:$0xf]
        %v230 = vld [vmem:[%s202] sm:$0xff]
        %v231 = vld [vmem:[%s202 + $0x8] sm:$0xff]
        %v232 = vld [vmem:[%s202 + $0x10] sm:$0xff]
        %v233 = vld [vmem:[%s202 + $0x18] sm:$0xff]
        %v234 = vld [vmem:[%s202 + $0x20] sm:$0xff]
        %v235 = vld [vmem:[%s202 + $0x28] sm:$0xff]
        %v236 = vld [vmem:[%s202 + $0x30] sm:$0xff]
        %v237 = vld [vmem:[%s202 + $0x38] sm:$0xff]
        %v238 = vld [vmem:[%s202 + $0x40] sm:$0xff]
        %v239 = vld [vmem:[%s202 + $0x48] sm:$0xff]
        %v240 = vld [vmem:[%s202 + $0x50] sm:$0xff]
        %v241 = vld [vmem:[%s202 + $0x58] sm:$0xff]
        %v242 = vld [vmem:[%s202 + $0x60] sm:$0xff]
        %v243 = vld [vmem:[%s202 + $0x68] sm:$0xff]
        %v244 = vld [vmem:[%s202 + $0x70] sm:$0xff]
        %v245 = vld [vmem:[%s202 + $0x78] sm:$0xff]
        %v246 = vld [vmem:[%s202 + $0x80] sm:$0xff]
        %v247 = vld [vmem:[%s202 + $0x88] sm:$0xff]
        %v248 = vld [vmem:[%s202 + $0x90] sm:$0xff]
        %v249 = vld [vmem:[%s202 + $0x98] sm:$0xff]
        %v250 = vld [vmem:[%s202 + $0xa0] sm:$0xff]
        %v251 = vld [vmem:[%s202 + $0xa8] sm:$0xff]
        %v252 = vld [vmem:[%s202 + $0xb0] sm:$0xff]
        %v253 = vld [vmem:[%s202 + $0xb8] sm:$0xff]
        %v254 = vld [vmem:[%s202 + $0xc0] sm:$0xff]
        %v255 = vld [vmem:[%s202 + $0xc8] sm:$0xff]
        %v256 = vld [vmem:[%s202 + $0xd0] sm:$0xff]
        %v257 = vld [vmem:[%s202 + $0xd8] sm:$0xff]
        %v258 = vld [vmem:[%s202 + $0xe0] sm:$0xff]
        %v259 = vld [vmem:[%s202 + $0xe8] sm:$0xff]
        %v260 = vld [vmem:[%s202 + $0xf0] sm:$0xff]
        %v261 = vld [vmem:[%s202 + $0xf8] sm:$0xff]
        %v294 = vunpack.c.l.b16 %v230
        %v295 = vunpack.c.h.b16 %v230
        %v296 = vunpack.c.l.b16 %v231
        %v297 = vunpack.c.h.b16 %v231
        %v298 = vunpack.c.l.b16 %v232
        %v299 = vunpack.c.h.b16 %v232
        %v300 = vunpack.c.l.b16 %v233
        %v301 = vunpack.c.h.b16 %v233
        %v302 = vunpack.c.l.b16 %v234
        %v303 = vunpack.c.h.b16 %v234
        %v304 = vunpack.c.l.b16 %v235
        %v305 = vunpack.c.h.b16 %v235
        %v306 = vunpack.c.l.b16 %v236
        %v307 = vunpack.c.h.b16 %v236
        %v308 = vunpack.c.l.b16 %v237
        %v309 = vunpack.c.h.b16 %v237
        %v310 = vunpack.c.l.b16 %v238
        %v311 = vunpack.c.h.b16 %v238
        %v312 = vunpack.c.l.b16 %v239
        %v313 = vunpack.c.h.b16 %v239
        %v314 = vunpack.c.l.b16 %v240
        %v315 = vunpack.c.h.b16 %v240
        %v316 = vunpack.c.l.b16 %v241
        %v317 = vunpack.c.h.b16 %v241
        %v318 = vunpack.c.l.b16 %v242
        %v319 = vunpack.c.h.b16 %v242
        %v320 = vunpack.c.l.b16 %v243
        %v321 = vunpack.c.h.b16 %v243
        %v322 = vunpack.c.l.b16 %v244
        %v323 = vunpack.c.h.b16 %v244
        %v324 = vunpack.c.l.b16 %v245
        %v325 = vunpack.c.h.b16 %v245
        %v326 = vunpack.c.l.b16 %v246
        %v327 = vunpack.c.h.b16 %v246
        %v328 = vunpack.c.l.b16 %v247
        %v329 = vunpack.c.h.b16 %v247
        %v330 = vunpack.c.l.b16 %v248
        %v331 = vunpack.c.h.b16 %v248
        %v332 = vunpack.c.l.b16 %v249
        %v333 = vunpack.c.h.b16 %v249
        %v334 = vunpack.c.l.b16 %v250
        %v335 = vunpack.c.h.b16 %v250
        %v336 = vunpack.c.l.b16 %v251
        %v337 = vunpack.c.h.b16 %v251
        %v338 = vunpack.c.l.b16 %v252
        %v339 = vunpack.c.h.b16 %v252
        %v340 = vunpack.c.l.b16 %v253
        %v341 = vunpack.c.h.b16 %v253
        %v342 = vunpack.c.l.b16 %v254
        %v343 = vunpack.c.h.b16 %v254
        %v344 = vunpack.c.l.b16 %v255
        %v345 = vunpack.c.h.b16 %v255
        %v346 = vunpack.c.l.b16 %v256
        %v347 = vunpack.c.h.b16 %v256
        %v348 = vunpack.c.l.b16 %v257
        %v349 = vunpack.c.h.b16 %v257
        %v350 = vunpack.c.l.b16 %v258
        %v351 = vunpack.c.h.b16 %v258
        %v352 = vunpack.c.l.b16 %v259
        %v353 = vunpack.c.h.b16 %v259
        %v354 = vunpack.c.l.b16 %v260
        %v355 = vunpack.c.h.b16 %v260
        %v356 = vunpack.c.l.b16 %v261
        %v357 = vunpack.c.h.b16 %v261
        %v358 = vpack.c.b16 %v298, %v294
        %v359 = vpack.c.b16 %v299, %v295
        %v360 = vpack.c.b16 %v300, %v296
        %v361 = vpack.c.b16 %v301, %v297
        %v362 = vpack.c.b16 %v306, %v302
        %v363 = vpack.c.b16 %v307, %v303
        %v364 = vpack.c.b16 %v308, %v304
        %v365 = vpack.c.b16 %v309, %v305
        %v366 = vpack.c.b16 %v314, %v310
        %v367 = vpack.c.b16 %v315, %v311
        %v368 = vpack.c.b16 %v316, %v312
        %v369 = vpack.c.b16 %v317, %v313
        %v370 = vpack.c.b16 %v322, %v318
        %v371 = vpack.c.b16 %v323, %v319
        %v372 = vpack.c.b16 %v324, %v320
        %v373 = vpack.c.b16 %v325, %v321
        %v374 = vpack.c.b16 %v330, %v326
        %v375 = vpack.c.b16 %v331, %v327
        %v376 = vpack.c.b16 %v332, %v328
        %v377 = vpack.c.b16 %v333, %v329
        %v378 = vpack.c.b16 %v338, %v334
        %v379 = vpack.c.b16 %v339, %v335
        %v380 = vpack.c.b16 %v340, %v336
        %v381 = vpack.c.b16 %v341, %v337
        %v382 = vpack.c.b16 %v346, %v342
        %v383 = vpack.c.b16 %v347, %v343
        %v384 = vpack.c.b16 %v348, %v344
        %v385 = vpack.c.b16 %v349, %v345
        %v386 = vpack.c.b16 %v354, %v350
        %v387 = vpack.c.b16 %v355, %v351
        %v388 = vpack.c.b16 %v356, %v352
        %v389 = vpack.c.b16 %v357, %v353
        %422 = vmatprep.subr.bf16.mxu0 %v387
        %423 = vmatpush1.bf16.msra.mxu0 %v386
        %424 = vmatprep.subr.bf16.mxu0 %v383
        %425 = vmatpush1.bf16.msra.mxu0 %v382
        %426 = vmatprep.subr.bf16.mxu0 %v379
        %427 = vmatpush1.bf16.msra.mxu0 %v378
        %428 = vmatprep.subr.bf16.mxu0 %v375
        %429 = vmatpush1.bf16.msra.mxu0 %v374
        %430 = vmatprep.subr.bf16.mxu0 %v371
        %431 = vmatpush1.bf16.msra.mxu0 %v370
        %432 = vmatprep.subr.bf16.mxu0 %v367
        %433 = vmatpush1.bf16.msra.mxu0 %v366
        %434 = vmatprep.subr.bf16.mxu0 %v363
        %435 = vmatpush1.bf16.msra.mxu0 %v362
        %436 = vmatprep.subr.bf16.mxu0 %v359
        %437 = vmatpush1.bf16.msra.mxu0 %v358
        %438 = vmatprep.subr.bf16.mxu0 0
        %439 = vmatpush2.bf16.msra.mxu0 0
        %440 = vmatprep.subr.bf16.mxu0 0
        %441 = vmatpush2.bf16.msra.mxu0 0
        %442 = vmatprep.subr.bf16.mxu0 0
        %443 = vmatpush2.bf16.msra.mxu0 0
        %444 = vmatprep.subr.bf16.mxu0 0
        %445 = vmatpush2.bf16.msra.mxu0 0
        %446 = vmatprep.subr.bf16.mxu0 0
        %447 = vmatpush2.bf16.msra.mxu0 0
        %448 = vmatprep.subr.bf16.mxu0 0
        %449 = vmatpush2.bf16.msra.mxu0 0
        %450 = vmatprep.subr.bf16.mxu0 0
        %451 = vmatpush2.bf16.msra.mxu0 0
        %452 = vmatprep.subr.bf16.mxu0 0
        %453 = vmatpush2.bf16.msra.mxu0 0
        %454 = vmatprep.mubr.bf16.mxu0 0
        %455 = vmatmul.mubr.bf16.gmra.mxu0 %v229
        %v456 = vpop.f32.mrf.mxu0
        %v457 = vadd.f32 0.0, %v456
        %v458 = vpop.f32.mrf.mxu0
        %v459 = vadd.f32 0.0, %v458
        %v460 = vpop.f32.mrf.mxu0
        %v461 = vpop.f32.mrf.mxu0
        %462 = vdwg.mxu0
        %463 = vmatprep.subr.bf16.mxu0 %v389
        %464 = vmatpush1.bf16.msra.mxu0 %v388
        %465 = vmatprep.subr.bf16.mxu0 %v385
        %466 = vmatpush1.bf16.msra.mxu0 %v384
        %467 = vmatprep.subr.bf16.mxu0 %v381
        %468 = vmatpush1.bf16.msra.mxu0 %v380
        %469 = vmatprep.subr.bf16.mxu0 %v377
        %470 = vmatpush1.bf16.msra.mxu0 %v376
        %471 = vmatprep.subr.bf16.mxu0 %v373
        %472 = vmatpush1.bf16.msra.mxu0 %v372
        %473 = vmatprep.subr.bf16.mxu0 %v369
        %474 = vmatpush1.bf16.msra.mxu0 %v368
        %475 = vmatprep.subr.bf16.mxu0 %v365
        %476 = vmatpush1.bf16.msra.mxu0 %v364
        %477 = vmatprep.subr.bf16.mxu0 %v361
        %478 = vmatpush1.bf16.msra.mxu0 %v360
        %479 = vmatprep.subr.bf16.mxu0 0
        %480 = vmatpush2.bf16.msra.mxu0 0
        %481 = vmatprep.subr.bf16.mxu0 0
        %482 = vmatpush2.bf16.msra.mxu0 0
        %483 = vmatprep.subr.bf16.mxu0 0
        %484 = vmatpush2.bf16.msra.mxu0 0
        %485 = vmatprep.subr.bf16.mxu0 0
        %486 = vmatpush2.bf16.msra.mxu0 0
        %487 = vmatprep.subr.bf16.mxu0 0
        %488 = vmatpush2.bf16.msra.mxu0 0
        %489 = vmatprep.subr.bf16.mxu0 0
        %490 = vmatpush2.bf16.msra.mxu0 0
        %491 = vmatprep.subr.bf16.mxu0 0
        %492 = vmatpush2.bf16.msra.mxu0 0
        %493 = vmatprep.subr.bf16.mxu0 0
        %494 = vmatpush2.bf16.msra.mxu0 0
        %495 = vmatprep.mubr.bf16.mxu0 0
        %496 = vmatmul.mubr.bf16.gmra.mxu0 %v229
        %v497 = vpop.f32.mrf.mxu0
        %v498 = vadd.f32 0.0, %v497
        %v499 = vpop.f32.mrf.mxu0
        %v500 = vadd.f32 0.0, %v499
        %v501 = vpop.f32.mrf.mxu0
        %v502 = vpop.f32.mrf.mxu0
        %503 = vdwg.mxu0
        %504 = vst [vmem:[%s226] sm:$0xff] %v457
        %505 = vst [vmem:[%s226 + $0x8] sm:$0xff] %v459
        %506 = vst [vmem:[%s226 + $0x10] sm:$0xff] %v498
        %507 = vst [vmem:[%s226 + $0x18] sm:$0xff] %v500
        %s508 = smul.u32 4, %s13
        %p509 = scmp.lt.s32.totalorder %s508, 7
        %s510 = scalar_select %p509, %s508, 7
        %s511 = smul.addr %s510, 8
        %s512 = scalar_lea.vmem %s2, %s511
        // Predicated region
        $region52: #{dialog_model_forward.3} parent=46 // pred_check
          %p513 = pneg %p78
        $region53: #{dialog_model_forward.3} parent=46 // pred_check_branch
          %515 = sbr.rel (%p513) target = $region55
        $region54: #{dialog_model_forward.3} parent=46 // pred_region
          %s516 = smul.u32 4, %s13
        $region55: #{dialog_model_forward.3} parent=46 // pred_fallthru
          _
      $region47: #{dialog_model_forward.3} parent=5 // pred_fallthru
        _
      %p517 = scmp.le.s32.totalorder 2, %s8
      // Predicated region
      $region56: #{dialog_model_forward.3} parent=5 // pred_check
        %p518 = pneg %p517
      $region57: #{dialog_model_forward.3} parent=5 // pred_check_branch
        %520 = sbr.rel (%p518) target = $region59
      $region58: #{dialog_model_forward.3} parent=5 // pred_region
        %s521 = ssub.s32 %s8, 2
        // Predicated region
        $region60: #{dialog_model_forward.3} parent=58 // pred_check
          %p522 = pneg %p84
        $region61: #{dialog_model_forward.3} parent=58 // pred_check_branch
          %524 = sbr.rel (%p522) target = $region63
        $region62: #{dialog_model_forward.3} parent=58 // pred_region
          %s525 = smul.u32 4, %s14
          %p526 = scmp.lt.s32.totalorder %s525, 7
          %s527 = scalar_select %p526, %s525, 7
          %s528 = smul.addr %s527, 8
          %s529 = scalar_lea.vmem %s2, %s528
        $region63: #{dialog_model_forward.3} parent=58 // pred_fallthru
          _
      $region59: #{dialog_model_forward.3} parent=5 // pred_fallthru
        _
    $region6: #{dialog_model_forward.3} parent=1 // loop_footer
      %s12 = sadd.s32 1, %s8
    $region7: #{dialog_model_forward.3} parent=1 // loop_footer_branch
      %7 = sbr.rel target = $region3
    $region8: #{dialog_model_forward.3} parent=1 // loop_exit
      _

// kernel: dialog_model_forward.5
$region0: #{dialog_model_forward.5}
  #allocation0 [shape = 'u32[]', space=smem, size = 0x4, offset = 0x4, fixed_abs, tag = 'smem constant byte address 0x4 - core index']
  #allocation1 [shape = 'u32[144,128]{1,0:T(1,128)}', space=vmem, size = 0x12000, scoped, tag = 'internal scratch']
  #allocation2 [shape = 'f32[2,4]{1,0:T(2,128)}', space=vmem, size = 0x400, scoped, tag = 'scratch operand']
  %s0 = inlined_call_operand.vmem [shape: f32[2,2,4,256], index: 0, kind: input, shape index: {}]
  %s1 = inlined_call_operand.vmem [shape: f32[2,4], index: 1, kind: input, shape index: {}]
  %s2 = inlined_call_operand.vmem [shape: f32[2,4], index: 2, kind: input, shape index: {}]
  %s3 = inlined_call_operand.hbm [shape: f32[2,4], index: 3, kind: output, shape index: {0}]
  %s4 = inlined_call_operand.hbm [shape: f32[2,4], index: 4, kind: output, shape index: {1}]
  %s5 = inlined_call_operand.hbm [shape: f32[2,4], index: 5, kind: output, shape index: {2}]
  %6 = xla_tuple %s3, %s4, %s5
  %s7 = sld [smem:[#allocation0]]
  $region107: #{dialog_model_forward.5} parent=0
    _
  %s9 = ssub.s32 1, %s7
  %s10 = scalar_select 0, %s9, %s7
  $region1: #{dialog_model_forward.5} parent=0
    #allocation3 [shape = 'u8[16384]{0}', space=vmem, size = 0x4000, scoped, tag = 'input window, operand 0']
    #allocation4 [shape = 'u8[1024]{0}', space=vmem, size = 0x400, scoped, tag = 'output window, operand 0, single buffered']
    #allocation5 [shape = 's32[2]{0}', space=sflag, size = 0x8, scoped, tag = 'scoped memory for dialog_model_forward.5']
    #allocation6 [shape = 'u8[1024]{0}', space=vmem, size = 0x400, scoped, tag = 'output window, operand 1, single buffered']
    #allocation7 [shape = 's32[1]{0}', space=sflag, size = 0x4, scoped, tag = 'scoped memory for dialog_model_forward.5']
    #allocation8 [shape = 'u8[1024]{0}', space=vmem, size = 0x400, scoped, tag = 'output window, operand 2, single buffered']
    %11 = vsyncpa [#allocation5], 0
    %12 = vsyncpa [#allocation7], 0
    loop: start=0, step=1, limit=4
    $region2: #{dialog_model_forward.5} parent=1 // loop_pre_header
      _
    $region3: #{dialog_model_forward.5} parent=1 // loop_header
      %s14 = sphi 0, %s18
      %p15 = scmp.ge.s32.totalorder %s14, 4
      %s24 = sphi 0, %s26
      %s27 = sphi 0, %s24
      %s28 = sphi 0, %s27
      %s44 = sphi 0, %s28
      %s48 = sphi 0, %s48
      %s50 = sphi 0, %s48
      %s51 = sphi 0, %s50
      %s65 = sphi 0, %s51
      %s69 = sphi 0, %s69
      %s71 = sphi 0, %s69
      %s72 = sphi 0, %s71
      %s86 = sphi 0, %s72
      %s90 = sphi 0, %s90
      %s92 = sphi 0, %s90
      %s93 = sphi 0, %s92
      %s107 = sphi 0, %s93
      %s111 = sphi 0, %s111
      %s113 = sphi 0, %s111
      %s114 = sphi 0, %s113
      %s128 = sphi 0, %s114
      %s132 = sphi 0, %s132
      %s134 = sphi 0, %s132
      %s135 = sphi 0, %s134
      %s149 = sphi 0, %s135
    $region4: #{dialog_model_forward.5} parent=1 // loop_header_branch
      %17 = sbr.rel (%p15) target = $region8
    $region5: #{dialog_model_forward.5} parent=1 // loop_body
      %s19 = ssub.s32 %s14, 1
      %s20 = ssub.s32 %s14, 2
      %s21 = sadd.s32 %s14, 1
      %s22 = ssub.s32 %s14, %s21
      %p23 = scmp.eq.s32.totalorder %s22, 0
      %s25 = sadd.s32 %s24, 1
      %s26 = scalar_select %p23, %s24, %s25
      %p29 = pneg %p23
      %p30 = scmp.eq.s32.totalorder %s14, 1
      %p31 = por %p29, %p30
      %p32 = scmp.ne.s32.totalorder %s24, %s27
      %p33 = scmp.eq.s32.totalorder %s14, 0
      %p34 = por %p32, %p33
      %p35 = scmp.ne.s32.totalorder %s24, %s27
      %p36 = scmp.eq.s32.totalorder %s19, 1
      %p37 = por %p35, %p36
      %p38 = scmp.ne.s32.totalorder %s27, %s28
      %p39 = scmp.eq.s32.totalorder %s19, 0
      %p40 = por %p38, %p39
      %p41 = scmp.ne.s32.totalorder %s27, %s28
      %p42 = scmp.eq.s32.totalorder %s20, 1
      %p43 = por %p41, %p42
      %p45 = scmp.ne.s32.totalorder %s28, %s44
      %p46 = scmp.eq.s32.totalorder %s20, 0
      %p47 = por %p45, %p46
      %s49 = sadd.s32 %s48, 1
      %p52 = scmp.eq.s32.totalorder %s14, 1
      %p53 = scmp.ne.s32.totalorder %s48, %s50
      %p54 = scmp.eq.s32.totalorder %s14, 0
      %p55 = por %p53, %p54
      %p56 = scmp.ne.s32.totalorder %s48, %s50
      %p57 = scmp.eq.s32.totalorder %s19, 1
      %p58 = por %p56, %p57
      %p59 = scmp.ne.s32.totalorder %s50, %s51
      %p60 = scmp.eq.s32.totalorder %s19, 0
      %p61 = por %p59, %p60
      %p62 = scmp.ne.s32.totalorder %s50, %s51
      %p63 = scmp.eq.s32.totalorder %s20, 1
      %p64 = por %p62, %p63
      %p66 = scmp.ne.s32.totalorder %s51, %s65
      %p67 = scmp.eq.s32.totalorder %s20, 0
      %p68 = por %p66, %p67
      %s70 = sadd.s32 %s69, 1
      %p73 = scmp.eq.s32.totalorder %s14, 1
      %p74 = scmp.ne.s32.totalorder %s69, %s71
      %p75 = scmp.eq.s32.totalorder %s14, 0
      %p76 = por %p74, %p75
      %p77 = scmp.ne.s32.totalorder %s69, %s71
      %p78 = scmp.eq.s32.totalorder %s19, 1
      %p79 = por %p77, %p78
      %p80 = scmp.ne.s32.totalorder %s71, %s72
      %p81 = scmp.eq.s32.totalorder %s19, 0
      %p82 = por %p80, %p81
      %p83 = scmp.ne.s32.totalorder %s71, %s72
      %p84 = scmp.eq.s32.totalorder %s20, 1
      %p85 = por %p83, %p84
      %p87 = scmp.ne.s32.totalorder %s72, %s86
      %p88 = scmp.eq.s32.totalorder %s20, 0
      %p89 = por %p87, %p88
      %s91 = sadd.s32 %s90, 1
      %p94 = scmp.eq.s32.totalorder %s14, 1
      %p95 = scmp.ne.s32.totalorder %s90, %s92
      %p96 = scmp.eq.s32.totalorder %s14, 0
      %p97 = por %p95, %p96
      %p98 = scmp.ne.s32.totalorder %s90, %s92
      %p99 = scmp.eq.s32.totalorder %s19, 1
      %p100 = por %p98, %p99
      %p101 = scmp.ne.s32.totalorder %s92, %s93
      %p102 = scmp.eq.s32.totalorder %s19, 0
      %p103 = por %p101, %p102
      %p104 = scmp.ne.s32.totalorder %s92, %s93
      %p105 = scmp.eq.s32.totalorder %s20, 1
      %p106 = por %p104, %p105
      %p108 = scmp.ne.s32.totalorder %s93, %s107
      %p109 = scmp.eq.s32.totalorder %s20, 0
      %p110 = por %p108, %p109
      %s112 = sadd.s32 %s111, 1
      %p115 = scmp.eq.s32.totalorder %s14, 1
      %p116 = scmp.ne.s32.totalorder %s111, %s113
      %p117 = scmp.eq.s32.totalorder %s14, 0
      %p118 = por %p116, %p117
      %p119 = scmp.ne.s32.totalorder %s111, %s113
      %p120 = scmp.eq.s32.totalorder %s19, 1
      %p121 = por %p119, %p120
      %p122 = scmp.ne.s32.totalorder %s113, %s114
      %p123 = scmp.eq.s32.totalorder %s19, 0
      %p124 = por %p122, %p123
      %p125 = scmp.ne.s32.totalorder %s113, %s114
      %p126 = scmp.eq.s32.totalorder %s20, 1
      %p127 = por %p125, %p126
      %p129 = scmp.ne.s32.totalorder %s114, %s128
      %p130 = scmp.eq.s32.totalorder %s20, 0
      %p131 = por %p129, %p130
      %s133 = sadd.s32 %s132, 1
      %p136 = scmp.eq.s32.totalorder %s14, 1
      %p137 = scmp.ne.s32.totalorder %s132, %s134
      %p138 = scmp.eq.s32.totalorder %s14, 0
      %p139 = por %p137, %p138
      %p140 = scmp.ne.s32.totalorder %s132, %s134
      %p141 = scmp.eq.s32.totalorder %s19, 1
      %p142 = por %p140, %p141
      %p143 = scmp.ne.s32.totalorder %s134, %s135
      %p144 = scmp.eq.s32.totalorder %s19, 0
      %p145 = por %p143, %p144
      %p146 = scmp.ne.s32.totalorder %s134, %s135
      %p147 = scmp.eq.s32.totalorder %s20, 1
      %p148 = por %p146, %p147
      %p150 = scmp.ne.s32.totalorder %s135, %s149
      %p151 = scmp.eq.s32.totalorder %s20, 0
      %p152 = por %p150, %p151
      %p153 = scmp.le.s32.totalorder 1, %s14
      %p154 = scmp.lt.s32.totalorder %s14, 3
      %p155 = pnand %p153, %p154
      %p156 = pneg %p155
      // Predicated region
      $region9: #{dialog_model_forward.5} parent=5 // pred_check
        _
      $region10: #{dialog_model_forward.5} parent=5 // pred_check_branch
        %158 = sbr.rel (%p155) target = $region12
      $region11: #{dialog_model_forward.5} parent=5 // pred_region
        %s159 = ssub.s32 %s14, 1
        // Predicated region
        $region13: #{dialog_model_forward.5} parent=11 // pred_check
          %p160 = pneg %p61
        $region14: #{dialog_model_forward.5} parent=11 // pred_check_branch
          %162 = sbr.rel (%p160) target = $region16
        $region15: #{dialog_model_forward.5} parent=11 // pred_region
          _
        $region16: #{dialog_model_forward.5} parent=11 // pred_fallthru
          _
        // Predicated region
        $region17: #{dialog_model_forward.5} parent=11 // pred_check
          %p163 = pneg %p82
        $region18: #{dialog_model_forward.5} parent=11 // pred_check_branch
          %165 = sbr.rel (%p163) target = $region20
        $region19: #{dialog_model_forward.5} parent=11 // pred_region
          _
        $region20: #{dialog_model_forward.5} parent=11 // pred_fallthru
          _
      $region12: #{dialog_model_forward.5} parent=5 // pred_fallthru
        _
      %p166 = scmp.lt.s32.totalorder %s14, 2
      // Predicated region
      $region21: #{dialog_model_forward.5} parent=5 // pred_check
        %p167 = pneg %p166
      $region22: #{dialog_model_forward.5} parent=5 // pred_check_branch
        %169 = sbr.rel (%p167) target = $region24
      $region23: #{dialog_model_forward.5} parent=5 // pred_region
        // Predicated region
        $region25: #{dialog_model_forward.5} parent=23 // pred_check
          %p170 = pneg %p34
        $region26: #{dialog_model_forward.5} parent=23 // pred_check_branch
          %172 = sbr.rel (%p170) target = $region28
        $region27: #{dialog_model_forward.5} parent=23 // pred_region
          %s173 = sand.u32 %s24, 1
          %s174 = sand.u32 %s24, 1
          %s175 = smul.addr %s174, 16
          %s176 = scalar_lea.vmem [#allocation3], %s175
          %s177 = smul.addr %s14, 2
          %s178 = smul.addr %s177, 4
          %s179 = scalar_lea.vmem %s0, %s178
          // Predicated region
          $region29: #{dialog_model_forward.5} parent=27 // pred_check
            _
          $region30: #{dialog_model_forward.5} parent=27 // pred_check_branch
            %181 = sbr.rel (0) target = $region32
          $region31: #{dialog_model_forward.5} parent=27 // pred_region
            // Predicated region
            $region33: #{dialog_model_forward.5} parent=31 // pred_check
              _
            $region34: #{dialog_model_forward.5} parent=31 // pred_check_branch
              %183 = sbr.rel (0) target = $region36
            $region35: #{dialog_model_forward.5} parent=31 // pred_region
              // Predicated region
              $region48: #{dialog_model_forward.5} parent=35 // pred_check
                _
              $region49: #{dialog_model_forward.5} parent=35 // pred_check_branch
                %201 = sbr.rel (0) target = $region51
              $region50: #{dialog_model_forward.5} parent=35 // pred_region
                loop: start=0, step=1, limit=1
                $region52: #{dialog_model_forward.5} parent=50 // loop_pre_header
                  _
                $region53: #{dialog_model_forward.5} parent=50 // loop_header
                  %s203 = sphi 0, %s207
                  %p204 = scmp.ge.s32.totalorder %s203, 1
                  %s208 = sphi %s179, %s179
                  %s209 = sphi %s176, %s176
                $region54: #{dialog_model_forward.5} parent=50 // loop_header_branch
                  %206 = sbr.rel (%p204) target = $region58
                $region55: #{dialog_model_forward.5} parent=50 // loop_body
                  %v210 = vld [vmem:[%s208] sm:$0xff]
                  %211 = vst [vmem:[%s209] sm:$0xff] %v210
                  %v212 = vld [vmem:[%s208 + $0x10] sm:$0xff]
                  %213 = vst [vmem:[%s209 + $0x8] sm:$0xff] %v212
                $region56: #{dialog_model_forward.5} parent=50 // loop_footer
                  %s207 = sadd.s32 1, %s203
                $region57: #{dialog_model_forward.5} parent=50 // loop_footer_branch
                  %202 = sbr.rel target = $region53
                $region58: #{dialog_model_forward.5} parent=50 // loop_exit
                  _
              $region51: #{dialog_model_forward.5} parent=35 // pred_fallthru
                _
              // Predicated region
              $region59: #{dialog_model_forward.5} parent=35 // pred_check
                _
              $region60: #{dialog_model_forward.5} parent=35 // pred_check_branch
                %215 = sbr.rel target = $region62
              $region61: #{dialog_model_forward.5} parent=35 // pred_region
                _
              $region62: #{dialog_model_forward.5} parent=35 // pred_fallthru
                _
            $region36: #{dialog_model_forward.5} parent=31 // pred_fallthru
              _
            // Predicated region
            $region37: #{dialog_model_forward.5} parent=31 // pred_check
              _
            $region38: #{dialog_model_forward.5} parent=31 // pred_check_branch
              %185 = sbr.rel target = $region40
            $region39: #{dialog_model_forward.5} parent=31 // pred_region
              %s187 = ssub.s32 256, 1
              loop: start=0, step=1, limit=1
              $region41: #{dialog_model_forward.5} parent=39 // loop_pre_header
                _
              $region42: #{dialog_model_forward.5} parent=39 // loop_header
                %s189 = sphi 0, %s193
                %p190 = scmp.ge.s32.totalorder %s189, 1
                %s194 = sphi %s179, %s179
                %s195 = sphi %s176, %s176
              $region43: #{dialog_model_forward.5} parent=39 // loop_header_branch
                %192 = sbr.rel (%p190) target = $region47
              $region44: #{dialog_model_forward.5} parent=39 // loop_body
                %v196 = vld [vmem:[%s194] sm:%s187]
                %197 = vst [vmem:[%s195] sm:%s187] %v196
                %v198 = vld [vmem:[%s194 + $0x10] sm:%s187]
                %199 = vst [vmem:[%s195 + $0x8] sm:%s187] %v198
              $region45: #{dialog_model_forward.5} parent=39 // loop_footer
                %s193 = sadd.s32 1, %s189
              $region46: #{dialog_model_forward.5} parent=39 // loop_footer_branch
                %188 = sbr.rel target = $region42
              $region47: #{dialog_model_forward.5} parent=39 // loop_exit
                _
            $region40: #{dialog_model_forward.5} parent=31 // pred_fallthru
              _
          $region32: #{dialog_model_forward.5} parent=27 // pred_fallthru
            _
          %216 = vnop
        $region28: #{dialog_model_forward.5} parent=23 // pred_fallthru
          _
      $region24: #{dialog_model_forward.5} parent=5 // pred_fallthru
        _
      %p217 = scmp.le.s32.totalorder 1, %s14
      %p218 = scmp.lt.s32.totalorder %s14, 3
      %p219 = pnand %p217, %p218
      %p220 = pneg %p219
      // Predicated region
      $region63: #{dialog_model_forward.5} parent=5 // pred_check
        _
      $region64: #{dialog_model_forward.5} parent=5 // pred_check_branch
        %222 = sbr.rel (%p219) target = $region66
      $region65: #{dialog_model_forward.5} parent=5 // pred_region
        %s223 = ssub.s32 %s14, 1
        %s224 = sand.u32 %s27, 1
        %s225 = sand.u32 %s27, 1
        %s226 = smul.addr %s225, 16
        %s227 = scalar_lea.vmem [#allocation3], %s226
        // Predicated region
        $region67: #{dialog_model_forward.5} parent=65 // pred_check
          %p228 = pneg %p40
        $region68: #{dialog_model_forward.5} parent=65 // pred_check_branch
          %230 = sbr.rel (%p228) target = $region70
        $region69: #{dialog_model_forward.5} parent=65 // pred_region
          _
        $region70: #{dialog_model_forward.5} parent=65 // pred_fallthru
          _
        %s231 = sand.u32 %s27, 1
        %s232 = sand.u32 %s27, 1
        %s233 = smul.addr %s232, 16
        %s234 = scalar_lea.vmem [#allocation3], %s233
        %p235 = pneg %p40
        %p236 = pneg %p37
        %p237 = pneg %p61
        %p238 = pneg %p58
        %p239 = pneg %p82
        %p240 = pneg %p79
        %p241 = pneg %p103
        %p242 = pneg %p100
        %p243 = pneg %p124
        %p244 = pneg %p121
        %p245 = pneg %p145
        %p246 = pneg %p142
        %p247 = scmp.eq.s32.totalorder %s19, 0
        // Predicated region
        $region71: #{dialog_model_forward.5} parent=65 // pred_check
          %p248 = pneg %p247
        $region72: #{dialog_model_forward.5} parent=65 // pred_check_branch
          %250 = sbr.rel (%p248) target = $region74
        $region73: #{dialog_model_forward.5} parent=65 // pred_region
          %vm251 = vcmask 25600
          %252 = vst.msk [vmem:[#allocation2] sm:$0x3] %vm251, 0.0
        $region74: #{dialog_model_forward.5} parent=65 // pred_fallthru
          _
        %v253 = vld [vmem:[#allocation2] sm:$0x3]
        %v254 = vld [vmem:[%s227] sm:$0xff]
        %v255 = vld [vmem:[%s227 + $0x8] sm:$0xff]
        %v258 = vcombine.high %v254, %v254
        %v259 = vcombine.high %v255, %v255
        %vm262 = vcmask 1043456
        %v263 = vsel %vm262, %v254, 0.0
        %v264 = vsel %vm262, %v258, 0.0
        %v265 = vadd.f32 %v263, %v264
        %266 = vadd.xlane.f32.xlu0 %v265
        %v267 = vpop.xlane.xlu0 %266
        %v268 = vsel %vm262, %v255, 0.0
        %v269 = vsel %vm262, %v259, 0.0
        %v270 = vadd.f32 %v268, %v269
        %271 = vadd.xlane.f32.xlu0 %v270
        %v272 = vpop.xlane.xlu0 %271
        %v275 = vlaneseq
        %v276 = vand.u32 %v275, 127
        %v277 = vlaneseq
        %v278 = vshrl.u32 %v277, 7
        %v279 = vsub.s32 %v276, %v278
        %v280 = vrot.slane %v267, %v279
        %v281 = vlaneseq
        %v282 = vshrl.u32 %v281, 7
        %v283 = vsub.s32 %v276, %v282
        %v284 = vrot.slane %v272, %v283
        %vm285 = vcmask 1041409
        %v286 = vsel %vm285, %v284, %v280
        %v288 = vadd.f32 %v253, %v286
        %vm289 = vcmask 25600
        %290 = vst.msk [vmem:[#allocation2] sm:$0x3] %vm289, %v288
        %p291 = scmp.eq.s32.totalorder %s19, 1
        // Predicated region
        $region75: #{dialog_model_forward.5} parent=65 // pred_check
          %p292 = pneg %p291
        $region76: #{dialog_model_forward.5} parent=65 // pred_check_branch
          %294 = sbr.rel (%p292) target = $region78
        $region77: #{dialog_model_forward.5} parent=65 // pred_region
          %v295 = vld [vmem:[#allocation2] sm:$0x3]
          %v296 = vmul.f32 %v295, 0.001953125
          %v297 = vsel %vm289, %v296, -inf
          %298 = vmax.xlane.f32.xlu0 %v297
          %v299 = vpop.xlane.xlu0 %298
          %v300 = vsub.f32 %v296, %v299
          %v301 = vmul.f32 %v300, 1.442695
          %v302 = vpow.pop %v301
          %v303 = vsel %vm289, %v302, 0.0
          %304 = vadd.xlane.f32.xlu0 %v303
          %v305 = vpop.xlane.xlu0 %304
          %v306 = vrcp.pop %v305
          %v307 = vmul.f32 %v302, %v306
          %308 = vst.msk [vmem:[#allocation4] sm:$0x3] %vm289, %v307
          %v309 = vld [vmem:[%s1] sm:$0x3]
          %v310 = vsel %vm289, %v309, -inf
          %311 = vmax.xlane.f32.xlu0 %v310
          %v312 = vpop.xlane.xlu0 %311
          %v313 = vsub.f32 %v309, %v312
          %v314 = vmul.f32 %v313, 1.442695
          %v315 = vpow.pop %v314
          %v316 = vsel %vm289, %v315, 0.0
          %317 = vadd.xlane.f32.xlu0 %v316
          %v318 = vpop.xlane.xlu0 %317
          %v319 = vlog2.pop %v318
          %v320 = vmul.f32 %v319, 0.6931472
          %v321 = vsub.f32 %v313, %v320
          %322 = vst.msk [vmem:[#allocation6] sm:$0x3] %vm289, %v321
          %v323 = vld [vmem:[%s2] sm:$0x3]
          %v324 = vsel %vm289, %v323, -inf
          %325 = vmax.xlane.f32.xlu0 %v324
          %v326 = vpop.xlane.xlu0 %325
          %v327 = vsub.f32 %v323, %v326
          %v328 = vmul.f32 %v327, 1.442695
          %v329 = vpow.pop %v328
          %v330 = vsel %vm289, %v329, 0.0
          %331 = vadd.xlane.f32.xlu0 %v330
          %v332 = vpop.xlane.xlu0 %331
          %v333 = vlog2.pop %v332
          %v334 = vmul.f32 %v333, 0.6931472
          %v335 = vsub.f32 %v327, %v334
          %336 = vst.msk [vmem:[#allocation8] sm:$0x3] %vm289, %v335
        $region78: #{dialog_model_forward.5} parent=65 // pred_fallthru
          _
        // Predicated region
        $region79: #{dialog_model_forward.5} parent=65 // pred_check
          %p337 = pneg %p100
        $region80: #{dialog_model_forward.5} parent=65 // pred_check_branch
          %339 = sbr.rel (%p337) target = $region82
        $region81: #{dialog_model_forward.5} parent=65 // pred_region
          %s341 = ssub.s32 32, 32
          %342 = vsyncadd [#allocation5], %s341
          %s344 = sshll.u32 [#allocation4], 4
          %s345 = int_to_ptr.vmem [resolvable:$true] %s344
          %347 = dma.vmem_to_hbm [thread:$0]  %s345, 32, %s3, [#allocation5]
        $region82: #{dialog_model_forward.5} parent=65 // pred_fallthru
          _
        // Predicated region
        $region83: #{dialog_model_forward.5} parent=65 // pred_check
          %p348 = pneg %p121
        $region84: #{dialog_model_forward.5} parent=65 // pred_check_branch
          %350 = sbr.rel (%p348) target = $region86
        $region85: #{dialog_model_forward.5} parent=65 // pred_region
          %s352 = ssub.s32 32, 32
          %353 = vsyncadd [#allocation7], %s352
          %s355 = sshll.u32 [#allocation6], 4
          %s356 = int_to_ptr.vmem [resolvable:$true] %s355
          %358 = dma.vmem_to_hbm [thread:$0]  %s356, 32, %s4, [#allocation7]
        $region86: #{dialog_model_forward.5} parent=65 // pred_fallthru
          _
        // Predicated region
        $region87: #{dialog_model_forward.5} parent=65 // pred_check
          %p359 = pneg %p142
        $region88: #{dialog_model_forward.5} parent=65 // pred_check_branch
          %361 = sbr.rel (%p359) target = $region90
        $region89: #{dialog_model_forward.5} parent=65 // pred_region
          %s363 = ssub.s32 32, 32
          %364 = vsyncadd [#allocation7], %s363
          %s366 = sshll.u32 [#allocation8], 4
          %s367 = int_to_ptr.vmem [resolvable:$true] %s366
          %369 = dma.vmem_to_hbm [thread:$0]  %s367, 32, %s5, [#allocation7]
        $region90: #{dialog_model_forward.5} parent=65 // pred_fallthru
          _
        // Predicated region
        $region91: #{dialog_model_forward.5} parent=65 // pred_check
          %p370 = pneg %p100
        $region92: #{dialog_model_forward.5} parent=65 // pred_check_branch
          %372 = sbr.rel (%p370) target = $region94
        $region93: #{dialog_model_forward.5} parent=65 // pred_region
          %373 = dma.done [#allocation5], 32
        $region94: #{dialog_model_forward.5} parent=65 // pred_fallthru
          _
        // Predicated region
        $region95: #{dialog_model_forward.5} parent=65 // pred_check
          %p374 = pneg %p121
        $region96: #{dialog_model_forward.5} parent=65 // pred_check_branch
          %376 = sbr.rel (%p374) target = $region98
        $region97: #{dialog_model_forward.5} parent=65 // pred_region
          %377 = dma.done [#allocation7], 32
        $region98: #{dialog_model_forward.5} parent=65 // pred_fallthru
          _
        // Predicated region
        $region99: #{dialog_model_forward.5} parent=65 // pred_check
          %p378 = pneg %p142
        $region100: #{dialog_model_forward.5} parent=65 // pred_check_branch
          %380 = sbr.rel (%p378) target = $region102
        $region101: #{dialog_model_forward.5} parent=65 // pred_region
          %381 = dma.done [#allocation7], 32
        $region102: #{dialog_model_forward.5} parent=65 // pred_fallthru
          _
      $region66: #{dialog_model_forward.5} parent=5 // pred_fallthru
        _
      %p382 = scmp.le.s32.totalorder 2, %s14
      // Predicated region
      $region103: #{dialog_model_forward.5} parent=5 // pred_check
        %p383 = pneg %p382
      $region104: #{dialog_model_forward.5} parent=5 // pred_check_branch
        %385 = sbr.rel (%p383) target = $region106
      $region105: #{dialog_model_forward.5} parent=5 // pred_region
        %s386 = ssub.s32 %s14, 2
      $region106: #{dialog_model_forward.5} parent=5 // pred_fallthru
        _
    $region6: #{dialog_model_forward.5} parent=1 // loop_footer
      %s18 = sadd.s32 1, %s14
    $region7: #{dialog_model_forward.5} parent=1 // loop_footer_branch
      %13 = sbr.rel target = $region3
    $region8: #{dialog_model_forward.5} parent=1 // loop_exit
      _
    %387 = vsyncpa [#allocation5], 1
    %s388 = scalar_lea.sflag [#allocation5], 1
    %389 = vsyncpa %s388, 1
    %390 = vsyncpa [#allocation7], 1

</llo_original>
